<compile_context>
chip_gen: v7x
topology: tpu7x:2x2x1
jax: 0.10.0
libtpu: 0.0.40
codegen_flags: <defaults>
</compile_context>

<pallas_src>
import jax
import jax.numpy as jnp
from jax import lax
from jax.experimental import pallas as pl
from jax.experimental.pallas import tpu as pltpu

_F32 = jnp.float32
_L = 32          # SPPCSPC signal length (4 + 24 + 4)
_NEG = -1e30     # -inf surrogate for max-pool padding
_VPU_K = 4       # matmuls with K <= this are unrolled on the VPU

# ---------------------------------------------------------------------------
# Packed parameter layout: every tensor lives at an 8-aligned row offset of a
# single (296, 32) f32 buffer (natural orientation, columns 0:cols).
#   * cv3_w / cv6_w are stored fused-tap: (cout, 3*cin) with column blocks
#     [tap@l-1 | tap@l | tap@l+1].
#   * "pool" is the constant 32->4 adaptive-average-pool matrix (hoisted).
# ---------------------------------------------------------------------------
_PARAM_SHAPES = [
    ("fc1_w", (2, 24)), ("fc1_b", (1, 24)),
    ("cv1_w", (4, 1)),  ("cv1_b", (4, 1)),
    ("cv2_w", (4, 1)),  ("cv2_b", (4, 1)),
    ("cv3_w", (4, 12)), ("cv3_b", (4, 1)),
    ("cv4_w", (4, 4)),  ("cv4_b", (4, 1)),
    ("cv5_w", (4, 16)), ("cv5_b", (4, 1)),
    ("cv6_w", (4, 12)), ("cv6_b", (4, 1)),
    ("cv7_w", (1, 8)),  ("cv7_b", (1, 1)),
    ("pool",  (32, 4)),
    ("lstm_w", (8, 16)), ("lstm_b", (1, 16)),
    ("ca1_f1w", (1, 2)), ("ca1_f1b", (1, 1)), ("ca1_f2w", (2, 1)), ("ca1_f2b", (2, 1)),
    ("ca2_f1w", (2, 4)), ("ca2_f1b", (2, 1)), ("ca2_f2w", (4, 2)), ("ca2_f2b", (4, 1)),
    ("fc3_w", (16, 4)), ("fc3_b", (1, 4)),
    ("fc4_w", (8, 4)),  ("fc4_b", (1, 4)),
    ("fc5_w", (8, 4)),  ("fc5_b", (1, 4)),
]


def _build_layout():
    layout, row = {}, 0
    for name, (r, c) in _PARAM_SHAPES:
        layout[name] = (row, (r, c))
        row += -(-r // 8) * 8          # 8-row aligned starts -> clean sub-tile loads
    return layout, row


_LAYOUT, _PACK_ROWS = _build_layout()   # _PACK_ROWS == 296
_PACK_COLS = 32


def init_params(key):
    keys = jax.random.split(key, len(_PARAM_SHAPES))
    params = {}
    for k, (name, shape) in zip(keys, _PARAM_SHAPES):
        if name == "pool":
            continue
        scale = 0.1 if name.endswith("b") else 0.4
        params[name] = jax.random.normal(k, shape, dtype=_F32) * scale
    # constant adaptive average pool 32 -> 4 (groups of 8 averaged)
    params["pool"] = jnp.repeat(jnp.eye(4, dtype=_F32), 8, axis=0) / 8.0
    return params


def pack_params(params):
    buf = jnp.zeros((_PACK_ROWS, _PACK_COLS), _F32)
    for name, (r0, (r, c)) in _LAYOUT.items():
        buf = buf.at[r0:r0 + r, 0:c].set(params[name].astype(_F32))
    return buf


# ---------------------------------------------------------------------------
# In-kernel math helpers
# ---------------------------------------------------------------------------
def _sig(v):                       # exact sigmoid, divide-free (tanh is on the EUP)
    return 0.5 * (jnp.tanh(0.5 * v) + 1.0)


def _silu(v):
    return v * _sig(v)


def _relu(v):
    return jnp.maximum(v, 0.0)


def _mm(a, b):
    # (M,K)@(K,N).  K <= 4 -> unrolled broadcast mul+add on the VPU (these
    # M=1/N<=32 shapes are pure latency on the MXU); larger K -> MXU.
    k = a.shape[1]
    if k <= _VPU_K:
        acc = a[:, 0:1] * b[0:1, :]
        for i in range(1, k):
            acc = acc + a[:, i:i + 1] * b[i:i + 1, :]
        return acc
    return jnp.dot(a, b, preferred_element_type=_F32)


def _shift_left(v, d, fill):       # column l := v[:, l+d], right edge filled
    pad = jnp.full((v.shape[0], d), fill, _F32)
    return jnp.concatenate([v[:, d:], pad], axis=1)


def _shift_right(v, d, fill):      # column l := v[:, l-d], left edge filled
    pad = jnp.full((v.shape[0], d), fill, _F32)
    return jnp.concatenate([pad, v[:, :v.shape[1] - d]], axis=1)


def _pconv(v, w, b):               # pointwise conv + SiLU
    return _silu(_mm(w, v) + b)


def _conv3(v, w, b):
    # k=3, zero-padded conv along lanes as ONE (cout, 3*cin) @ (3*cin, L) matmul.
    stacked = jnp.concatenate(
        [_shift_right(v, 1, 0.0), v, _shift_left(v, 1, 0.0)], axis=0)
    return _silu(_mm(w, stacked) + b)


def _maxpool5(v):                  # 'same' max pool, k=5, -inf padding
    m = v
    for d in (1, 2):
        m = jnp.maximum(m, jnp.maximum(_shift_left(v, d, _NEG),
                                       _shift_right(v, d, _NEG)))
    return m


def _chan_att(xr, f1w, f1b, f2w, f2b):
    # TODO(synk): ChannelAttention body not in the provided source — CBAM-style
    # reconstruction: avg/max descriptors -> shared MLP -> sigmoid gate; returns
    # the (C, C) Gram matrix of the gated channels.
    avg = jnp.mean(xr, axis=1, keepdims=True)         # (C, 1)
    mx = jnp.max(xr, axis=1, keepdims=True)           # (C, 1)
    am = jnp.concatenate([avg, mx], axis=1)           # (C, 2): shared MLP in one pass
    h = _relu(_mm(f1w, am) + f1b)                     # (Cr, 2)
    h = _mm(f2w, h) + f2b                             # (C, 2)  [mlp(avg) | mlp(max)]
    att = _sig(h[:, 0:1] + h[:, 1:2])                 # (C, 1)
    return lax.dot_general(xr * att, xr, (((1,), (1,)), ((), ())),
                           preferred_element_type=_F32)   # (C, C)


def _rows_to_lane_vec(g):
    # (C, C) -> (1, C*C); kept concat-based (no reshape) for Mosaic safety.
    return jnp.concatenate([g[i:i + 1, :] for i in range(g.shape[0])], axis=1)


# ---------------------------------------------------------------------------
# Fused kernel: one invocation == the whole T-step rollout
# ---------------------------------------------------------------------------
def make_kt_kernel(carry_prior_p=True):
    def kernel(x_ref, p_ref, out_ref, h1_scr):
        T = x_ref.shape[0]

        def W(name):
            r0, (r, c) = _LAYOUT[name]
            return p_ref[r0:r0 + r, 0:c]

        # ---- prologue, hoisted over the whole rollout --------------------
        # FC1 depends only on x: one batched (T,2)x(2,24) product, stashed in
        # VMEM and indexed per step (removes one matmul+ReLU from every step's
        # serial dependency chain).
        h1_scr[...] = _relu(_mm(x_ref[...], W("fc1_w")) + W("fc1_b"))   # (T, 24)

        # Hot weight slices hoisted above the time loop; the remaining small
        # tensors stay per-iteration VMEM loads (cheap, avoids vreg pressure).
        cv3_w, cv3_b = W("cv3_w"), W("cv3_b")
        cv5_w, cv5_b = W("cv5_w"), W("cv5_b")
        cv6_w, cv6_b = W("cv6_w"), W("cv6_b")
        lstm_w4 = W("lstm_w")[0:4, :]       # prior_R == 0 -> only rows 0:4 matter
        lstm_b = W("lstm_b")
        pool_w = W("pool")

        def step(t, prior_P_carry):
            prior_P_prev = (prior_P_carry if carry_prior_p
                            else jnp.zeros((1, 4), _F32))

            h1 = h1_scr[pl.ds(t, 1), :]                               # (1, 24)

            # in_yolov7 = cat(prior_Q (=0), FC1(x), prior_P) — conv layout (C=1, L=32)
            sig_cl = jnp.concatenate(
                [jnp.zeros((1, 4), _F32), h1, prior_P_prev], axis=1)  # (1, 32)

            # --- SPPCSPC (1-D reconstruction; TODO(synk): body not in source) ---
            b1 = _pconv(sig_cl, W("cv1_w"), W("cv1_b"))               # (4, 32)
            b1 = _conv3(b1, cv3_w, cv3_b)                             # (4, 32)
            x1 = _pconv(b1, W("cv4_w"), W("cv4_b"))                   # (4, 32)
            mp5 = _maxpool5(x1)                                       # SPPF composition:
            mp9 = _maxpool5(mp5)                                      # 5∘5 == 9
            mp13 = _maxpool5(mp9)                                     # 5∘5∘5 == 13
            spp = jnp.concatenate([x1, mp5, mp9, mp13], axis=0)       # (16, 32)
            y1 = _pconv(spp, cv5_w, cv5_b)                            # (4, 32)
            y1 = _conv3(y1, cv6_w, cv6_b)                             # (4, 32)
            y2 = _pconv(sig_cl, W("cv2_w"), W("cv2_b"))               # (4, 32)
            y = _pconv(jnp.concatenate([y1, y2], axis=0),
                       W("cv7_w"), W("cv7_b"))                        # (1, 32)
            prior_P = _mm(y, pool_w)                                  # 32 -> 4 avg pool

            # --- LSTM(8, 4), h0=c0=0; forget gate dead (f*c0 == 0).
            gates = _mm(prior_P, lstm_w4) + lstm_b                    # (1, 16), VPU K=4
            i_g = _sig(gates[:, 0:4])
            g_g = jnp.tanh(gates[:, 8:12])
            o_g = _sig(gates[:, 12:16])
            S = o_g * jnp.tanh(i_g * g_g)                             # (1, 4)

            # --- ChannelAttention1 on S (C=2, Lc=2)
            xr1 = jnp.concatenate([S[:, 0:2], S[:, 2:4]], axis=0)     # (2, 2)
            g1 = _chan_att(xr1, W("ca1_f1w"), W("ca1_f1b"),
                           W("ca1_f2w"), W("ca1_f2b"))                # (2, 2)
            S_att = _rows_to_lane_vec(g1)                             # (1, 4)

            # --- ChannelAttention2 on cat(prior_P, S) (C=4, Lc=2)
            xr2 = jnp.concatenate(
                [prior_P[:, 0:2], prior_P[:, 2:4], g1], axis=0)       # (4, 2)
            g2 = _chan_att(xr2, W("ca2_f1w"), W("ca2_f1b"),
                           W("ca2_f2w"), W("ca2_f2b"))                # (4, 4)
            ca2_row = _rows_to_lane_vec(g2)                           # (1, 16)

            kt = _relu(_mm(ca2_row, W("fc3_w")) + W("fc3_b"))         # (1, 4)
            o4 = _relu(_mm(jnp.concatenate([S_att, kt], axis=1),
                           W("fc4_w")) + W("fc4_b"))                  # (1, 4)
            p_new = _relu(_mm(jnp.concatenate([prior_P, o4], axis=1),
                              W("fc5_w")) + W("fc5_b"))               # (1, 4)

            # direct lane sub-slice stores into the resident output (no concat)
            out_ref[pl.ds(t, 1), 0:4] = kt
            out_ref[pl.ds(t, 1), 4:8] = p_new
            return p_new

        lax.fori_loop(0, T, step, jnp.zeros((1, 4), _F32))

    return kernel


# ---------------------------------------------------------------------------
# Wrappers
# ---------------------------------------------------------------------------
def kt_rollout(x_seq, packed_params, *, carry_prior_p=True):
    """Run T KtModule.forward() steps inside one pallas_call / one grid step.

    carry_prior_p=True : step 0 == isinit True/None, later steps == isinit=False
                         (prior_P carried in the fori_loop).
    carry_prior_p=False: literal default-arg semantics (reset every step).
    Returns (Kt_seq (T,1,1,4), prior_P_seq (T,1,1,4)).
    """
    # TODO(synk): for v7x a second TensorCore could be exposed via a parallel
    # batch axis over independent sequences; single-sequence rollout is serial.
    x_seq = jnp.asarray(x_seq, _F32).reshape(-1, 2)
    T = x_seq.shape[0]
    out = pl.pallas_call(
        make_kt_kernel(carry_prior_p),
        out_shape=jax.ShapeDtypeStruct((T, 8), _F32),
        grid=(1,),
        in_specs=[
            # whole trajectory and packed weights resident in VMEM (one DMA each)
            pl.BlockSpec((T, 2), lambda i: (0, 0)),
            pl.BlockSpec((_PACK_ROWS, _PACK_COLS), lambda i: (0, 0)),
        ],
        # output resident for the whole rollout -> single HBM writeback
        out_specs=pl.BlockSpec((T, 8), lambda i: (0, 0)),
        scratch_shapes=[pltpu.VMEM((T, 24), _F32)],   # hoisted FC1 activations
        compiler_params=pltpu.CompilerParams(
            dimension_semantics=("arbitrary",)),
    )(x_seq, packed_params)
    kt = out[:, 0:4].reshape(T, 1, 1, 4)
    prior_p = out[:, 4:8].reshape(T, 1, 1, 4)
    return kt, prior_p


def kt_forward(x, packed_params):
    # Single forward() call (isinit default): x has 2 elements -> Kt (1, 1, 4).
    kt, prior_p = kt_rollout(jnp.reshape(jnp.asarray(x, _F32), (1, 2)),
                             packed_params, carry_prior_p=False)
    return kt[0], prior_p[0]


if __name__ == "__main__":
    key = jax.random.PRNGKey(0)
    kx, kp = jax.random.split(key)
    params = init_params(kp)
    packed = pack_params(params)

    T = 8
    x_seq = jax.random.normal(kx, (T, 2), dtype=_F32)

    kt_seq, p_seq = jax.jit(kt_rollout)(x_seq, packed)
    jax.block_until_ready(kt_seq)
    assert kt_seq.shape == (T, 1, 1, 4) and p_seq.shape == (T, 1, 1, 4)

    kt1, p1 = jax.jit(kt_forward)(x_seq[0], packed)
    jax.block_until_ready(kt1)
    assert kt1.shape == (1, 1, 4) and p1.shape == (1, 1, 4)

    # step 0 of the carried rollout must match a fresh single call (both init to 0)
    assert jnp.allclose(kt1, kt_seq[0], atol=1e-5, rtol=1e-5)
    assert jnp.allclose(p1, p_seq[0], atol=1e-5, rtol=1e-5)

    print("KERNEL_OK")
</pallas_src>

<mosaic_0001>
module attributes {stable_mosaic.version = 11 : i64} {
  func.func @kernel(%arg0: i32, %arg1: memref<8x2xf32, #tpu.memory_space<vmem>>, %arg2: memref<296x32xf32, #tpu.memory_space<vmem>>, %arg3: memref<8x8xf32, #tpu.memory_space<vmem>>, %arg4: memref<8x24xf32, #tpu.memory_space<vmem>>) attributes {dimension_semantics = [#tpu.dimension_semantics<arbitrary>], iteration_bounds = array<i64: 1>, scalar_prefetch = 0 : i64, scratch_operands = 1 : i64, tpu.core_type = #tpu.core_type<tc>, window_params = [{pipeline_mode = #tpu.pipeline_mode<synchronous>, transform_indices = @transform_0, window_bounds = array<i64: 8, 2>}, {pipeline_mode = #tpu.pipeline_mode<synchronous>, transform_indices = @transform_1, window_bounds = array<i64: 296, 32>}, {pipeline_mode = #tpu.pipeline_mode<synchronous>, transform_indices = @transform_2, window_bounds = array<i64: 8, 8>}]} {
    %c0 = arith.constant 0 : index
    %c0_0 = arith.constant 0 : index
    %0 = vector.load %arg1[%c0, %c0_0] : memref<8x2xf32, #tpu.memory_space<vmem>>, vector<8x2xf32>
    %c0_1 = arith.constant 0 : index
    %c0_2 = arith.constant 0 : index
    %1 = vector.load %arg2[%c0_1, %c0_2] : memref<296x32xf32, #tpu.memory_space<vmem>>, vector<2x24xf32>
    %2 = vector.extract_strided_slice %0 {offsets = [0, 0], sizes = [8, 1], strides = [1, 1]} : vector<8x2xf32> to vector<8x1xf32>
    %3 = vector.extract_strided_slice %1 {offsets = [0, 0], sizes = [1, 24], strides = [1, 1]} : vector<2x24xf32> to vector<1x24xf32>
    %4 = vector.broadcast %2 : vector<8x1xf32> to vector<8x24xf32>
    %5 = vector.broadcast %3 : vector<1x24xf32> to vector<8x24xf32>
    %6 = arith.mulf %4, %5 : vector<8x24xf32>
    %7 = vector.extract_strided_slice %0 {offsets = [0, 1], sizes = [8, 1], strides = [1, 1]} : vector<8x2xf32> to vector<8x1xf32>
    %8 = vector.extract_strided_slice %1 {offsets = [1, 0], sizes = [1, 24], strides = [1, 1]} : vector<2x24xf32> to vector<1x24xf32>
    %9 = vector.broadcast %7 : vector<8x1xf32> to vector<8x24xf32>
    %10 = vector.broadcast %8 : vector<1x24xf32> to vector<8x24xf32>
    %11 = arith.mulf %9, %10 : vector<8x24xf32>
    %12 = arith.addf %6, %11 : vector<8x24xf32>
    %c8 = arith.constant 8 : index
    %c0_3 = arith.constant 0 : index
    %13 = vector.load %arg2[%c8, %c0_3] : memref<296x32xf32, #tpu.memory_space<vmem>>, vector<1x24xf32>
    %14 = vector.broadcast %13 : vector<1x24xf32> to vector<8x24xf32>
    %15 = arith.addf %12, %14 : vector<8x24xf32>
    %cst = arith.constant 0.000000e+00 : f32
    %16 = vector.broadcast %cst : f32 to vector<8x24xf32>
    %17 = arith.maximumf %15, %16 : vector<8x24xf32>
    %c0_4 = arith.constant 0 : index
    %c0_5 = arith.constant 0 : index
    %18 = vector.load %arg4[%c0_4, %c0_5] : memref<8x24xf32, #tpu.memory_space<vmem>>, vector<8x24xf32>
    tpu.vector_store %arg4[%c0_4, %c0_5], %17 {strides = array<i32>} : memref<8x24xf32, #tpu.memory_space<vmem>>, vector<8x24xf32>,
    %c48 = arith.constant 48 : index
    %c0_6 = arith.constant 0 : index
    %19 = vector.load %arg2[%c48, %c0_6] : memref<296x32xf32, #tpu.memory_space<vmem>>, vector<4x12xf32>
    %c56 = arith.constant 56 : index
    %c0_7 = arith.constant 0 : index
    %20 = vector.load %arg2[%c56, %c0_7] : memref<296x32xf32, #tpu.memory_space<vmem>>, vector<4x1xf32>
    %c80 = arith.constant 80 : index
    %c0_8 = arith.constant 0 : index
    %21 = vector.load %arg2[%c80, %c0_8] : memref<296x32xf32, #tpu.memory_space<vmem>>, vector<4x16xf32>
    %c88 = arith.constant 88 : index
    %c0_9 = arith.constant 0 : index
    %22 = vector.load %arg2[%c88, %c0_9] : memref<296x32xf32, #tpu.memory_space<vmem>>, vector<4x1xf32>
    %c96 = arith.constant 96 : index
    %c0_10 = arith.constant 0 : index
    %23 = vector.load %arg2[%c96, %c0_10] : memref<296x32xf32, #tpu.memory_space<vmem>>, vector<4x12xf32>
    %c104 = arith.constant 104 : index
    %c0_11 = arith.constant 0 : index
    %24 = vector.load %arg2[%c104, %c0_11] : memref<296x32xf32, #tpu.memory_space<vmem>>, vector<4x1xf32>
    %c160 = arith.constant 160 : index
    %c0_12 = arith.constant 0 : index
    %25 = vector.load %arg2[%c160, %c0_12] : memref<296x32xf32, #tpu.memory_space<vmem>>, vector<8x16xf32>
    %26 = vector.extract_strided_slice %25 {offsets = [0, 0], sizes = [4, 16], strides = [1, 1]} : vector<8x16xf32> to vector<4x16xf32>
    %c168 = arith.constant 168 : index
    %c0_13 = arith.constant 0 : index
    %27 = vector.load %arg2[%c168, %c0_13] : memref<296x32xf32, #tpu.memory_space<vmem>>, vector<1x16xf32>
    %c128 = arith.constant 128 : index
    %c0_14 = arith.constant 0 : index
    %28 = vector.load %arg2[%c128, %c0_14] : memref<296x32xf32, #tpu.memory_space<vmem>>, vector<32x4xf32>
    %cst_15 = arith.constant 0.000000e+00 : f32
    %29 = vector.broadcast %cst_15 : f32 to vector<1x4xf32>
    %c0_i32 = arith.constant 0 : i32
    %c8_i32 = arith.constant 8 : i32
    %30 = arith.addi %c0_i32, %c8_i32 : i32
    %c1_i32 = arith.constant 1 : i32
    %31 = scf.for %arg5 = %c0_i32 to %30 step %c1_i32 iter_args(%arg6 = %29) -> (vector<1x4xf32>)  : i32 {
      %32 = arith.index_cast %arg5 : i32 to index
      %c0_17 = arith.constant 0 : index
      %33 = vector.load %arg4[%32, %c0_17] : memref<8x24xf32, #tpu.memory_space<vmem>>, vector<1x24xf32>
      %cst_18 = arith.constant 0.000000e+00 : f32
      %34 = vector.broadcast %cst_18 : f32 to vector<1x4xf32>
      %35 = tpu.concatenate %34, %33, %arg6 in 1 : vector<1x4xf32>, vector<1x24xf32>, vector<1x4xf32> -> vector<1x32xf32>
      %c16 = arith.constant 16 : index
      %c0_19 = arith.constant 0 : index
      %36 = vector.load %arg2[%c16, %c0_19] : memref<296x32xf32, #tpu.memory_space<vmem>>, vector<4x1xf32>
      %c24 = arith.constant 24 : index
      %c0_20 = arith.constant 0 : index
      %37 = vector.load %arg2[%c24, %c0_20] : memref<296x32xf32, #tpu.memory_space<vmem>>, vector<4x1xf32>
      %38 = vector.broadcast %36 : vector<4x1xf32> to vector<4x32xf32>
      %39 = vector.broadcast %35 : vector<1x32xf32> to vector<4x32xf32>
      %40 = arith.mulf %38, %39 : vector<4x32xf32>
      %41 = vector.broadcast %37 : vector<4x1xf32> to vector<4x32xf32>
      %42 = arith.addf %40, %41 : vector<4x32xf32>
      %cst_21 = arith.constant 5.000000e-01 : f32
      %43 = vector.broadcast %cst_21 : f32 to vector<4x32xf32>
      %44 = arith.mulf %43, %42 : vector<4x32xf32>
      %45 = math.tanh %44 : vector<4x32xf32>
      %cst_22 = arith.constant 1.000000e+00 : f32
      %46 = vector.broadcast %cst_22 : f32 to vector<4x32xf32>
      %47 = arith.addf %45, %46 : vector<4x32xf32>
      %cst_23 = arith.constant 5.000000e-01 : f32
      %48 = vector.broadcast %cst_23 : f32 to vector<4x32xf32>
      %49 = arith.mulf %48, %47 : vector<4x32xf32>
      %50 = arith.mulf %42, %49 : vector<4x32xf32>
      %cst_24 = arith.constant 0.000000e+00 : f32
      %51 = vector.broadcast %cst_24 : f32 to vector<4x1xf32>
      %52 = vector.extract_strided_slice %50 {offsets = [0, 0], sizes = [4, 31], strides = [1, 1]} : vector<4x32xf32> to vector<4x31xf32>
      %53 = tpu.concatenate %51, %52 in 1 : vector<4x1xf32>, vector<4x31xf32> -> vector<4x32xf32>
      %cst_25 = arith.constant 0.000000e+00 : f32
      %54 = vector.broadcast %cst_25 : f32 to vector<4x1xf32>
      %55 = vector.extract_strided_slice %50 {offsets = [0, 1], sizes = [4, 31], strides = [1, 1]} : vector<4x32xf32> to vector<4x31xf32>
      %56 = tpu.concatenate %55, %54 in 1 : vector<4x31xf32>, vector<4x1xf32> -> vector<4x32xf32>
      %57 = tpu.concatenate %53, %50, %56 in 0 : vector<4x32xf32>, vector<4x32xf32>, vector<4x32xf32> -> vector<12x32xf32>
      %cst_26 = arith.constant dense<0.000000e+00> : vector<4x32xf32>
      %58 = tpu.matmul %19, %57, %cst_26 {dimension_numbers = #tpu.dot_dimension_numbers<[1], [0], [0], [1], [0, 0, 1, 1], [], []>} : vector<4x12xf32>, vector<12x32xf32>, vector<4x32xf32> -> vector<4x32xf32>
      %59 = vector.broadcast %20 : vector<4x1xf32> to vector<4x32xf32>
      %60 = arith.addf %58, %59 : vector<4x32xf32>
      %cst_27 = arith.constant 5.000000e-01 : f32
      %61 = vector.broadcast %cst_27 : f32 to vector<4x32xf32>
      %62 = arith.mulf %61, %60 : vector<4x32xf32>
      %63 = math.tanh %62 : vector<4x32xf32>
      %cst_28 = arith.constant 1.000000e+00 : f32
      %64 = vector.broadcast %cst_28 : f32 to vector<4x32xf32>
      %65 = arith.addf %63, %64 : vector<4x32xf32>
      %cst_29 = arith.constant 5.000000e-01 : f32
      %66 = vector.broadcast %cst_29 : f32 to vector<4x32xf32>
      %67 = arith.mulf %66, %65 : vector<4x32xf32>
      %68 = arith.mulf %60, %67 : vector<4x32xf32>
      %c64 = arith.constant 64 : index
      %c0_30 = arith.constant 0 : index
      %69 = vector.load %arg2[%c64, %c0_30] : memref<296x32xf32, #tpu.memory_space<vmem>>, vector<4x4xf32>
      %c72 = arith.constant 72 : index
      %c0_31 = arith.constant 0 : index
      %70 = vector.load %arg2[%c72, %c0_31] : memref<296x32xf32, #tpu.memory_space<vmem>>, vector<4x1xf32>
      %71 = vector.extract_strided_slice %69 {offsets = [0, 0], sizes = [4, 1], strides = [1, 1]} : vector<4x4xf32> to vector<4x1xf32>
      %72 = vector.extract_strided_slice %68 {offsets = [0, 0], sizes = [1, 32], strides = [1, 1]} : vector<4x32xf32> to vector<1x32xf32>
      %73 = vector.broadcast %71 : vector<4x1xf32> to vector<4x32xf32>
      %74 = vector.broadcast %72 : vector<1x32xf32> to vector<4x32xf32>
      %75 = arith.mulf %73, %74 : vector<4x32xf32>
      %76 = vector.extract_strided_slice %69 {offsets = [0, 1], sizes = [4, 1], strides = [1, 1]} : vector<4x4xf32> to vector<4x1xf32>
      %77 = vector.extract_strided_slice %68 {offsets = [1, 0], sizes = [1, 32], strides = [1, 1]} : vector<4x32xf32> to vector<1x32xf32>
      %78 = vector.broadcast %76 : vector<4x1xf32> to vector<4x32xf32>
      %79 = vector.broadcast %77 : vector<1x32xf32> to vector<4x32xf32>
      %80 = arith.mulf %78, %79 : vector<4x32xf32>
      %81 = arith.addf %75, %80 : vector<4x32xf32>
      %82 = vector.extract_strided_slice %69 {offsets = [0, 2], sizes = [4, 1], strides = [1, 1]} : vector<4x4xf32> to vector<4x1xf32>
      %83 = vector.extract_strided_slice %68 {offsets = [2, 0], sizes = [1, 32], strides = [1, 1]} : vector<4x32xf32> to vector<1x32xf32>
      %84 = vector.broadcast %82 : vector<4x1xf32> to vector<4x32xf32>
      %85 = vector.broadcast %83 : vector<1x32xf32> to vector<4x32xf32>
      %86 = arith.mulf %84, %85 : vector<4x32xf32>
      %87 = arith.addf %81, %86 : vector<4x32xf32>
      %88 = vector.extract_strided_slice %69 {offsets = [0, 3], sizes = [4, 1], strides = [1, 1]} : vector<4x4xf32> to vector<4x1xf32>
      %89 = vector.extract_strided_slice %68 {offsets = [3, 0], sizes = [1, 32], strides = [1, 1]} : vector<4x32xf32> to vector<1x32xf32>
      %90 = vector.broadcast %88 : vector<4x1xf32> to vector<4x32xf32>
      %91 = vector.broadcast %89 : vector<1x32xf32> to vector<4x32xf32>
      %92 = arith.mulf %90, %91 : vector<4x32xf32>
      %93 = arith.addf %87, %92 : vector<4x32xf32>
      %94 = vector.broadcast %70 : vector<4x1xf32> to vector<4x32xf32>
      %95 = arith.addf %93, %94 : vector<4x32xf32>
      %cst_32 = arith.constant 5.000000e-01 : f32
      %96 = vector.broadcast %cst_32 : f32 to vector<4x32xf32>
      %97 = arith.mulf %96, %95 : vector<4x32xf32>
      %98 = math.tanh %97 : vector<4x32xf32>
      %cst_33 = arith.constant 1.000000e+00 : f32
      %99 = vector.broadcast %cst_33 : f32 to vector<4x32xf32>
      %100 = arith.addf %98, %99 : vector<4x32xf32>
      %cst_34 = arith.constant 5.000000e-01 : f32
      %101 = vector.broadcast %cst_34 : f32 to vector<4x32xf32>
      %102 = arith.mulf %101, %100 : vector<4x32xf32>
      %103 = arith.mulf %95, %102 : vector<4x32xf32>
      %cst_35 = arith.constant -1.000000e+30 : f32
      %104 = vector.broadcast %cst_35 : f32 to vector<4x1xf32>
      %105 = vector.extract_strided_slice %103 {offsets = [0, 1], sizes = [4, 31], strides = [1, 1]} : vector<4x32xf32> to vector<4x31xf32>
      %106 = tpu.concatenate %105, %104 in 1 : vector<4x31xf32>, vector<4x1xf32> -> vector<4x32xf32>
      %cst_36 = arith.constant -1.000000e+30 : f32
      %107 = vector.broadcast %cst_36 : f32 to vector<4x1xf32>
      %108 = vector.extract_strided_slice %103 {offsets = [0, 0], sizes = [4, 31], strides = [1, 1]} : vector<4x32xf32> to vector<4x31xf32>
      %109 = tpu.concatenate %107, %108 in 1 : vector<4x1xf32>, vector<4x31xf32> -> vector<4x32xf32>
      %110 = arith.maximumf %106, %109 : vector<4x32xf32>
      %111 = arith.maximumf %103, %110 : vector<4x32xf32>
      %cst_37 = arith.constant -1.000000e+30 : f32
      %112 = vector.broadcast %cst_37 : f32 to vector<4x2xf32>
      %113 = vector.extract_strided_slice %103 {offsets = [0, 2], sizes = [4, 30], strides = [1, 1]} : vector<4x32xf32> to vector<4x30xf32>
      %114 = tpu.concatenate %113, %112 in 1 : vector<4x30xf32>, vector<4x2xf32> -> vector<4x32xf32>
      %cst_38 = arith.constant -1.000000e+30 : f32
      %115 = vector.broadcast %cst_38 : f32 to vector<4x2xf32>
      %116 = vector.extract_strided_slice %103 {offsets = [0, 0], sizes = [4, 30], strides = [1, 1]} : vector<4x32xf32> to vector<4x30xf32>
      %117 = tpu.concatenate %115, %116 in 1 : vector<4x2xf32>, vector<4x30xf32> -> vector<4x32xf32>
      %118 = arith.maximumf %114, %117 : vector<4x32xf32>
      %119 = arith.maximumf %111, %118 : vector<4x32xf32>
      %cst_39 = arith.constant -1.000000e+30 : f32
      %120 = vector.broadcast %cst_39 : f32 to vector<4x1xf32>
      %121 = vector.extract_strided_slice %119 {offsets = [0, 1], sizes = [4, 31], strides = [1, 1]} : vector<4x32xf32> to vector<4x31xf32>
      %122 = tpu.concatenate %121, %120 in 1 : vector<4x31xf32>, vector<4x1xf32> -> vector<4x32xf32>
      %cst_40 = arith.constant -1.000000e+30 : f32
      %123 = vector.broadcast %cst_40 : f32 to vector<4x1xf32>
      %124 = vector.extract_strided_slice %119 {offsets = [0, 0], sizes = [4, 31], strides = [1, 1]} : vector<4x32xf32> to vector<4x31xf32>
      %125 = tpu.concatenate %123, %124 in 1 : vector<4x1xf32>, vector<4x31xf32> -> vector<4x32xf32>
      %126 = arith.maximumf %122, %125 : vector<4x32xf32>
      %127 = arith.maximumf %119, %126 : vector<4x32xf32>
      %cst_41 = arith.constant -1.000000e+30 : f32
      %128 = vector.broadcast %cst_41 : f32 to vector<4x2xf32>
      %129 = vector.extract_strided_slice %119 {offsets = [0, 2], sizes = [4, 30], strides = [1, 1]} : vector<4x32xf32> to vector<4x30xf32>
      %130 = tpu.concatenate %129, %128 in 1 : vector<4x30xf32>, vector<4x2xf32> -> vector<4x32xf32>
      %cst_42 = arith.constant -1.000000e+30 : f32
      %131 = vector.broadcast %cst_42 : f32 to vector<4x2xf32>
      %132 = vector.extract_strided_slice %119 {offsets = [0, 0], sizes = [4, 30], strides = [1, 1]} : vector<4x32xf32> to vector<4x30xf32>
      %133 = tpu.concatenate %131, %132 in 1 : vector<4x2xf32>, vector<4x30xf32> -> vector<4x32xf32>
      %134 = arith.maximumf %130, %133 : vector<4x32xf32>
      %135 = arith.maximumf %127, %134 : vector<4x32xf32>
      %cst_43 = arith.constant -1.000000e+30 : f32
      %136 = vector.broadcast %cst_43 : f32 to vector<4x1xf32>
      %137 = vector.extract_strided_slice %135 {offsets = [0, 1], sizes = [4, 31], strides = [1, 1]} : vector<4x32xf32> to vector<4x31xf32>
      %138 = tpu.concatenate %137, %136 in 1 : vector<4x31xf32>, vector<4x1xf32> -> vector<4x32xf32>
      %cst_44 = arith.constant -1.000000e+30 : f32
      %139 = vector.broadcast %cst_44 : f32 to vector<4x1xf32>
      %140 = vector.extract_strided_slice %135 {offsets = [0, 0], sizes = [4, 31], strides = [1, 1]} : vector<4x32xf32> to vector<4x31xf32>
      %141 = tpu.concatenate %139, %140 in 1 : vector<4x1xf32>, vector<4x31xf32> -> vector<4x32xf32>
      %142 = arith.maximumf %138, %141 : vector<4x32xf32>
      %143 = arith.maximumf %135, %142 : vector<4x32xf32>
      %cst_45 = arith.constant -1.000000e+30 : f32
      %144 = vector.broadcast %cst_45 : f32 to vector<4x2xf32>
      %145 = vector.extract_strided_slice %135 {offsets = [0, 2], sizes = [4, 30], strides = [1, 1]} : vector<4x32xf32> to vector<4x30xf32>
      %146 = tpu.concatenate %145, %144 in 1 : vector<4x30xf32>, vector<4x2xf32> -> vector<4x32xf32>
      %cst_46 = arith.constant -1.000000e+30 : f32
      %147 = vector.broadcast %cst_46 : f32 to vector<4x2xf32>
      %148 = vector.extract_strided_slice %135 {offsets = [0, 0], sizes = [4, 30], strides = [1, 1]} : vector<4x32xf32> to vector<4x30xf32>
      %149 = tpu.concatenate %147, %148 in 1 : vector<4x2xf32>, vector<4x30xf32> -> vector<4x32xf32>
      %150 = arith.maximumf %146, %149 : vector<4x32xf32>
      %151 = arith.maximumf %143, %150 : vector<4x32xf32>
      %152 = tpu.concatenate %103, %119, %135, %151 in 0 : vector<4x32xf32>, vector<4x32xf32>, vector<4x32xf32>, vector<4x32xf32> -> vector<16x32xf32>
      %cst_47 = arith.constant dense<0.000000e+00> : vector<4x32xf32>
      %153 = tpu.matmul %21, %152, %cst_47 {dimension_numbers = #tpu.dot_dimension_numbers<[1], [0], [0], [1], [0, 0, 1, 1], [], []>} : vector<4x16xf32>, vector<16x32xf32>, vector<4x32xf32> -> vector<4x32xf32>
      %154 = vector.broadcast %22 : vector<4x1xf32> to vector<4x32xf32>
      %155 = arith.addf %153, %154 : vector<4x32xf32>
      %cst_48 = arith.constant 5.000000e-01 : f32
      %156 = vector.broadcast %cst_48 : f32 to vector<4x32xf32>
      %157 = arith.mulf %156, %155 : vector<4x32xf32>
      %158 = math.tanh %157 : vector<4x32xf32>
      %cst_49 = arith.constant 1.000000e+00 : f32
      %159 = vector.broadcast %cst_49 : f32 to vector<4x32xf32>
      %160 = arith.addf %158, %159 : vector<4x32xf32>
      %cst_50 = arith.constant 5.000000e-01 : f32
      %161 = vector.broadcast %cst_50 : f32 to vector<4x32xf32>
      %162 = arith.mulf %161, %160 : vector<4x32xf32>
      %163 = arith.mulf %155, %162 : vector<4x32xf32>
      %cst_51 = arith.constant 0.000000e+00 : f32
      %164 = vector.broadcast %cst_51 : f32 to vector<4x1xf32>
      %165 = vector.extract_strided_slice %163 {offsets = [0, 0], sizes = [4, 31], strides = [1, 1]} : vector<4x32xf32> to vector<4x31xf32>
      %166 = tpu.concatenate %164, %165 in 1 : vector<4x1xf32>, vector<4x31xf32> -> vector<4x32xf32>
      %cst_52 = arith.constant 0.000000e+00 : f32
      %167 = vector.broadcast %cst_52 : f32 to vector<4x1xf32>
      %168 = vector.extract_strided_slice %163 {offsets = [0, 1], sizes = [4, 31], strides = [1, 1]} : vector<4x32xf32> to vector<4x31xf32>
      %169 = tpu.concatenate %168, %167 in 1 : vector<4x31xf32>, vector<4x1xf32> -> vector<4x32xf32>
      %170 = tpu.concatenate %166, %163, %169 in 0 : vector<4x32xf32>, vector<4x32xf32>, vector<4x32xf32> -> vector<12x32xf32>
      %cst_53 = arith.constant dense<0.000000e+00> : vector<4x32xf32>
      %171 = tpu.matmul %23, %170, %cst_53 {dimension_numbers = #tpu.dot_dimension_numbers<[1], [0], [0], [1], [0, 0, 1, 1], [], []>} : vector<4x12xf32>, vector<12x32xf32>, vector<4x32xf32> -> vector<4x32xf32>
      %172 = vector.broadcast %24 : vector<4x1xf32> to vector<4x32xf32>
      %173 = arith.addf %171, %172 : vector<4x32xf32>
      %cst_54 = arith.constant 5.000000e-01 : f32
      %174 = vector.broadcast %cst_54 : f32 to vector<4x32xf32>
      %175 = arith.mulf %174, %173 : vector<4x32xf32>
      %176 = math.tanh %175 : vector<4x32xf32>
      %cst_55 = arith.constant 1.000000e+00 : f32
      %177 = vector.broadcast %cst_55 : f32 to vector<4x32xf32>
      %178 = arith.addf %176, %177 : vector<4x32xf32>
      %cst_56 = arith.constant 5.000000e-01 : f32
      %179 = vector.broadcast %cst_56 : f32 to vector<4x32xf32>
      %180 = arith.mulf %179, %178 : vector<4x32xf32>
      %181 = arith.mulf %173, %180 : vector<4x32xf32>
      %c32 = arith.constant 32 : index
      %c0_57 = arith.constant 0 : index
      %182 = vector.load %arg2[%c32, %c0_57] : memref<296x32xf32, #tpu.memory_space<vmem>>, vector<4x1xf32>
      %c40 = arith.constant 40 : index
      %c0_58 = arith.constant 0 : index
      %183 = vector.load %arg2[%c40, %c0_58] : memref<296x32xf32, #tpu.memory_space<vmem>>, vector<4x1xf32>
      %184 = vector.broadcast %182 : vector<4x1xf32> to vector<4x32xf32>
      %185 = vector.broadcast %35 : vector<1x32xf32> to vector<4x32xf32>
      %186 = arith.mulf %184, %185 : vector<4x32xf32>
      %187 = vector.broadcast %183 : vector<4x1xf32> to vector<4x32xf32>
      %188 = arith.addf %186, %187 : vector<4x32xf32>
      %cst_59 = arith.constant 5.000000e-01 : f32
      %189 = vector.broadcast %cst_59 : f32 to vector<4x32xf32>
      %190 = arith.mulf %189, %188 : vector<4x32xf32>
      %191 = math.tanh %190 : vector<4x32xf32>
      %cst_60 = arith.constant 1.000000e+00 : f32
      %192 = vector.broadcast %cst_60 : f32 to vector<4x32xf32>
      %193 = arith.addf %191, %192 : vector<4x32xf32>
      %cst_61 = arith.constant 5.000000e-01 : f32
      %194 = vector.broadcast %cst_61 : f32 to vector<4x32xf32>
      %195 = arith.mulf %194, %193 : vector<4x32xf32>
      %196 = arith.mulf %188, %195 : vector<4x32xf32>
      %197 = tpu.concatenate %181, %196 in 0 : vector<4x32xf32>, vector<4x32xf32> -> vector<8x32xf32>
      %c112 = arith.constant 112 : index
      %c0_62 = arith.constant 0 : index
      %198 = vector.load %arg2[%c112, %c0_62] : memref<296x32xf32, #tpu.memory_space<vmem>>, vector<1x8xf32>
      %c120 = arith.constant 120 : index
      %c0_63 = arith.constant 0 : index
      %199 = vector.load %arg2[%c120, %c0_63] : memref<296x32xf32, #tpu.memory_space<vmem>>, vector<1x1xf32>
      %cst_64 = arith.constant dense<0.000000e+00> : vector<1x32xf32>
      %200 = tpu.matmul %198, %197, %cst_64 {dimension_numbers = #tpu.dot_dimension_numbers<[1], [0], [0], [1], [0, 0, 1, 1], [], []>} : vector<1x8xf32>, vector<8x32xf32>, vector<1x32xf32> -> vector<1x32xf32>
      %201 = vector.broadcast %199 : vector<1x1xf32> to vector<1x32xf32>
      %202 = arith.addf %200, %201 : vector<1x32xf32>
      %cst_65 = arith.constant 5.000000e-01 : f32
      %203 = vector.broadcast %cst_65 : f32 to vector<1x32xf32>
      %204 = arith.mulf %203, %202 : vector<1x32xf32>
      %205 = math.tanh %204 : vector<1x32xf32>
      %cst_66 = arith.constant 1.000000e+00 : f32
      %206 = vector.broadcast %cst_66 : f32 to vector<1x32xf32>
      %207 = arith.addf %205, %206 : vector<1x32xf32>
      %cst_67 = arith.constant 5.000000e-01 : f32
      %208 = vector.broadcast %cst_67 : f32 to vector<1x32xf32>
      %209 = arith.mulf %208, %207 : vector<1x32xf32>
      %210 = arith.mulf %202, %209 : vector<1x32xf32>
      %cst_68 = arith.constant dense<0.000000e+00> : vector<1x4xf32>
      %211 = tpu.matmul %210, %28, %cst_68 {dimension_numbers = #tpu.dot_dimension_numbers<[1], [0], [0], [1], [0, 0, 1, 1], [], []>} : vector<1x32xf32>, vector<32x4xf32>, vector<1x4xf32> -> vector<1x4xf32>
      %212 = vector.extract_strided_slice %211 {offsets = [0, 0], sizes = [1, 1], strides = [1, 1]} : vector<1x4xf32> to vector<1x1xf32>
      %213 = vector.extract_strided_slice %26 {offsets = [0, 0], sizes = [1, 16], strides = [1, 1]} : vector<4x16xf32> to vector<1x16xf32>
      %214 = vector.broadcast %212 : vector<1x1xf32> to vector<1x16xf32>
      %215 = arith.mulf %214, %213 : vector<1x16xf32>
      %216 = vector.extract_strided_slice %211 {offsets = [0, 1], sizes = [1, 1], strides = [1, 1]} : vector<1x4xf32> to vector<1x1xf32>
      %217 = vector.extract_strided_slice %26 {offsets = [1, 0], sizes = [1, 16], strides = [1, 1]} : vector<4x16xf32> to vector<1x16xf32>
      %218 = vector.broadcast %216 : vector<1x1xf32> to vector<1x16xf32>
      %219 = arith.mulf %218, %217 : vector<1x16xf32>
      %220 = arith.addf %215, %219 : vector<1x16xf32>
      %221 = vector.extract_strided_slice %211 {offsets = [0, 2], sizes = [1, 1], strides = [1, 1]} : vector<1x4xf32> to vector<1x1xf32>
      %222 = vector.extract_strided_slice %26 {offsets = [2, 0], sizes = [1, 16], strides = [1, 1]} : vector<4x16xf32> to vector<1x16xf32>
      %223 = vector.broadcast %221 : vector<1x1xf32> to vector<1x16xf32>
      %224 = arith.mulf %223, %222 : vector<1x16xf32>
      %225 = arith.addf %220, %224 : vector<1x16xf32>
      %226 = vector.extract_strided_slice %211 {offsets = [0, 3], sizes = [1, 1], strides = [1, 1]} : vector<1x4xf32> to vector<1x1xf32>
      %227 = vector.extract_strided_slice %26 {offsets = [3, 0], sizes = [1, 16], strides = [1, 1]} : vector<4x16xf32> to vector<1x16xf32>
      %228 = vector.broadcast %226 : vector<1x1xf32> to vector<1x16xf32>
      %229 = arith.mulf %228, %227 : vector<1x16xf32>
      %230 = arith.addf %225, %229 : vector<1x16xf32>
      %231 = arith.addf %230, %27 : vector<1x16xf32>
      %232 = vector.extract_strided_slice %231 {offsets = [0, 0], sizes = [1, 4], strides = [1, 1]} : vector<1x16xf32> to vector<1x4xf32>
      %cst_69 = arith.constant 5.000000e-01 : f32
      %233 = vector.broadcast %cst_69 : f32 to vector<1x4xf32>
      %234 = arith.mulf %233, %232 : vector<1x4xf32>
      %235 = math.tanh %234 : vector<1x4xf32>
      %cst_70 = arith.constant 1.000000e+00 : f32
      %236 = vector.broadcast %cst_70 : f32 to vector<1x4xf32>
      %237 = arith.addf %235, %236 : vector<1x4xf32>
      %cst_71 = arith.constant 5.000000e-01 : f32
      %238 = vector.broadcast %cst_71 : f32 to vector<1x4xf32>
      %239 = arith.mulf %238, %237 : vector<1x4xf32>
      %240 = vector.extract_strided_slice %231 {offsets = [0, 8], sizes = [1, 4], strides = [1, 1]} : vector<1x16xf32> to vector<1x4xf32>
      %241 = math.tanh %240 : vector<1x4xf32>
      %242 = vector.extract_strided_slice %231 {offsets = [0, 12], sizes = [1, 4], strides = [1, 1]} : vector<1x16xf32> to vector<1x4xf32>
      %cst_72 = arith.constant 5.000000e-01 : f32
      %243 = vector.broadcast %cst_72 : f32 to vector<1x4xf32>
      %244 = arith.mulf %243, %242 : vector<1x4xf32>
      %245 = math.tanh %244 : vector<1x4xf32>
      %cst_73 = arith.constant 1.000000e+00 : f32
      %246 = vector.broadcast %cst_73 : f32 to vector<1x4xf32>
      %247 = arith.addf %245, %246 : vector<1x4xf32>
      %cst_74 = arith.constant 5.000000e-01 : f32
      %248 = vector.broadcast %cst_74 : f32 to vector<1x4xf32>
      %249 = arith.mulf %248, %247 : vector<1x4xf32>
      %250 = arith.mulf %239, %241 : vector<1x4xf32>
      %251 = math.tanh %250 : vector<1x4xf32>
      %252 = arith.mulf %249, %251 : vector<1x4xf32>
      %253 = vector.extract_strided_slice %252 {offsets = [0, 0], sizes = [1, 2], strides = [1, 1]} : vector<1x4xf32> to vector<1x2xf32>
      %254 = vector.extract_strided_slice %252 {offsets = [0, 2], sizes = [1, 2], strides = [1, 1]} : vector<1x4xf32> to vector<1x2xf32>
      %255 = tpu.concatenate %253, %254 in 0 : vector<1x2xf32>, vector<1x2xf32> -> vector<2x2xf32>
      %c176 = arith.constant 176 : index
      %c0_75 = arith.constant 0 : index
      %256 = vector.load %arg2[%c176, %c0_75] : memref<296x32xf32, #tpu.memory_space<vmem>>, vector<1x2xf32>
      %c184 = arith.constant 184 : index
      %c0_76 = arith.constant 0 : index
      %257 = vector.load %arg2[%c184, %c0_76] : memref<296x32xf32, #tpu.memory_space<vmem>>, vector<1x1xf32>
      %c192 = arith.constant 192 : index
      %c0_77 = arith.constant 0 : index
      %258 = vector.load %arg2[%c192, %c0_77] : memref<296x32xf32, #tpu.memory_space<vmem>>, vector<2x1xf32>
      %c200 = arith.constant 200 : index
      %c0_78 = arith.constant 0 : index
      %259 = vector.load %arg2[%c200, %c0_78] : memref<296x32xf32, #tpu.memory_space<vmem>>, vector<2x1xf32>
      %cst_79 = arith.constant dense<0.000000e+00> : vector<2xf32>
      %260 = vector.multi_reduction <add>, %255, %cst_79 [1] : vector<2x2xf32> to vector<2xf32>
      %261 = vector.shape_cast %260 : vector<2xf32> to vector<2x1xf32>
      %cst_80 = arith.constant 2.000000e+00 : f32
      %262 = vector.broadcast %cst_80 : f32 to vector<2x1xf32>
      %263 = arith.divf %261, %262 : vector<2x1xf32>
      %cst_81 = arith.constant dense<0xFF800000> : vector<2xf32>
      %264 = vector.multi_reduction <maximumf>, %255, %cst_81 [1] : vector<2x2xf32> to vector<2xf32>
      %265 = vector.shape_cast %264 : vector<2xf32> to vector<2x1xf32>
      %266 = tpu.concatenate %263, %265 in 1 : vector<2x1xf32>, vector<2x1xf32> -> vector<2x2xf32>
      %267 = vector.extract_strided_slice %256 {offsets = [0, 0], sizes = [1, 1], strides = [1, 1]} : vector<1x2xf32> to vector<1x1xf32>
      %268 = vector.extract_strided_slice %266 {offsets = [0, 0], sizes = [1, 2], strides = [1, 1]} : vector<2x2xf32> to vector<1x2xf32>
      %269 = vector.broadcast %267 : vector<1x1xf32> to vector<1x2xf32>
      %270 = arith.mulf %269, %268 : vector<1x2xf32>
      %271 = vector.extract_strided_slice %256 {offsets = [0, 1], sizes = [1, 1], strides = [1, 1]} : vector<1x2xf32> to vector<1x1xf32>
      %272 = vector.extract_strided_slice %266 {offsets = [1, 0], sizes = [1, 2], strides = [1, 1]} : vector<2x2xf32> to vector<1x2xf32>
      %273 = vector.broadcast %271 : vector<1x1xf32> to vector<1x2xf32>
      %274 = arith.mulf %273, %272 : vector<1x2xf32>
      %275 = arith.addf %270, %274 : vector<1x2xf32>
      %276 = vector.broadcast %257 : vector<1x1xf32> to vector<1x2xf32>
      %277 = arith.addf %275, %276 : vector<1x2xf32>
      %cst_82 = arith.constant 0.000000e+00 : f32
      %278 = vector.broadcast %cst_82 : f32 to vector<1x2xf32>
      %279 = arith.maximumf %277, %278 : vector<1x2xf32>
      %280 = vector.broadcast %258 : vector<2x1xf32> to vector<2x2xf32>
      %281 = vector.broadcast %279 : vector<1x2xf32> to vector<2x2xf32>
      %282 = arith.mulf %280, %281 : vector<2x2xf32>
      %283 = vector.broadcast %259 : vector<2x1xf32> to vector<2x2xf32>
      %284 = arith.addf %282, %283 : vector<2x2xf32>
      %285 = vector.extract_strided_slice %284 {offsets = [0, 0], sizes = [2, 1], strides = [1, 1]} : vector<2x2xf32> to vector<2x1xf32>
      %286 = vector.extract_strided_slice %284 {offsets = [0, 1], sizes = [2, 1], strides = [1, 1]} : vector<2x2xf32> to vector<2x1xf32>
      %287 = arith.addf %285, %286 : vector<2x1xf32>
      %cst_83 = arith.constant 5.000000e-01 : f32
      %288 = vector.broadcast %cst_83 : f32 to vector<2x1xf32>
      %289 = arith.mulf %288, %287 : vector<2x1xf32>
      %290 = math.tanh %289 : vector<2x1xf32>
      %cst_84 = arith.constant 1.000000e+00 : f32
      %291 = vector.broadcast %cst_84 : f32 to vector<2x1xf32>
      %292 = arith.addf %290, %291 : vector<2x1xf32>
      %cst_85 = arith.constant 5.000000e-01 : f32
      %293 = vector.broadcast %cst_85 : f32 to vector<2x1xf32>
      %294 = arith.mulf %293, %292 : vector<2x1xf32>
      %295 = vector.broadcast %294 : vector<2x1xf32> to vector<2x2xf32>
      %296 = arith.mulf %255, %295 : vector<2x2xf32>
      %cst_86 = arith.constant dense<0.000000e+00> : vector<2x2xf32>
      %297 = tpu.matmul %296, %255, %cst_86 {dimension_numbers = #tpu.dot_dimension_numbers<[1], [1], [0], [0], [0, 0, 1, 0], [], []>} : vector<2x2xf32>, vector<2x2xf32>, vector<2x2xf32> -> vector<2x2xf32>
      %298 = vector.extract_strided_slice %297 {offsets = [0, 0], sizes = [1, 2], strides = [1, 1]} : vector<2x2xf32> to vector<1x2xf32>
      %299 = vector.extract_strided_slice %297 {offsets = [1, 0], sizes = [1, 2], strides = [1, 1]} : vector<2x2xf32> to vector<1x2xf32>
      %300 = tpu.concatenate %298, %299 in 1 : vector<1x2xf32>, vector<1x2xf32> -> vector<1x4xf32>
      %301 = vector.extract_strided_slice %211 {offsets = [0, 0], sizes = [1, 2], strides = [1, 1]} : vector<1x4xf32> to vector<1x2xf32>
      %302 = vector.extract_strided_slice %211 {offsets = [0, 2], sizes = [1, 2], strides = [1, 1]} : vector<1x4xf32> to vector<1x2xf32>
      %303 = tpu.concatenate %301, %302, %297 in 0 : vector<1x2xf32>, vector<1x2xf32>, vector<2x2xf32> -> vector<4x2xf32>
      %c208 = arith.constant 208 : index
      %c0_87 = arith.constant 0 : index
      %304 = vector.load %arg2[%c208, %c0_87] : memref<296x32xf32, #tpu.memory_space<vmem>>, vector<2x4xf32>
      %c216 = arith.constant 216 : index
      %c0_88 = arith.constant 0 : index
      %305 = vector.load %arg2[%c216, %c0_88] : memref<296x32xf32, #tpu.memory_space<vmem>>, vector<2x1xf32>
      %c224 = arith.constant 224 : index
      %c0_89 = arith.constant 0 : index
      %306 = vector.load %arg2[%c224, %c0_89] : memref<296x32xf32, #tpu.memory_space<vmem>>, vector<4x2xf32>
      %c232 = arith.constant 232 : index
      %c0_90 = arith.constant 0 : index
      %307 = vector.load %arg2[%c232, %c0_90] : memref<296x32xf32, #tpu.memory_space<vmem>>, vector<4x1xf32>
      %cst_91 = arith.constant dense<0.000000e+00> : vector<4xf32>
      %308 = vector.multi_reduction <add>, %303, %cst_91 [1] : vector<4x2xf32> to vector<4xf32>
      %309 = vector.shape_cast %308 : vector<4xf32> to vector<4x1xf32>
      %cst_92 = arith.constant 2.000000e+00 : f32
      %310 = vector.broadcast %cst_92 : f32 to vector<4x1xf32>
      %311 = arith.divf %309, %310 : vector<4x1xf32>
      %cst_93 = arith.constant dense<0xFF800000> : vector<4xf32>
      %312 = vector.multi_reduction <maximumf>, %303, %cst_93 [1] : vector<4x2xf32> to vector<4xf32>
      %313 = vector.shape_cast %312 : vector<4xf32> to vector<4x1xf32>
      %314 = tpu.concatenate %311, %313 in 1 : vector<4x1xf32>, vector<4x1xf32> -> vector<4x2xf32>
      %315 = vector.extract_strided_slice %304 {offsets = [0, 0], sizes = [2, 1], strides = [1, 1]} : vector<2x4xf32> to vector<2x1xf32>
      %316 = vector.extract_strided_slice %314 {offsets = [0, 0], sizes = [1, 2], strides = [1, 1]} : vector<4x2xf32> to vector<1x2xf32>
      %317 = vector.broadcast %315 : vector<2x1xf32> to vector<2x2xf32>
      %318 = vector.broadcast %316 : vector<1x2xf32> to vector<2x2xf32>
      %319 = arith.mulf %317, %318 : vector<2x2xf32>
      %320 = vector.extract_strided_slice %304 {offsets = [0, 1], sizes = [2, 1], strides = [1, 1]} : vector<2x4xf32> to vector<2x1xf32>
      %321 = vector.extract_strided_slice %314 {offsets = [1, 0], sizes = [1, 2], strides = [1, 1]} : vector<4x2xf32> to vector<1x2xf32>
      %322 = vector.broadcast %320 : vector<2x1xf32> to vector<2x2xf32>
      %323 = vector.broadcast %321 : vector<1x2xf32> to vector<2x2xf32>
      %324 = arith.mulf %322, %323 : vector<2x2xf32>
      %325 = arith.addf %319, %324 : vector<2x2xf32>
      %326 = vector.extract_strided_slice %304 {offsets = [0, 2], sizes = [2, 1], strides = [1, 1]} : vector<2x4xf32> to vector<2x1xf32>
      %327 = vector.extract_strided_slice %314 {offsets = [2, 0], sizes = [1, 2], strides = [1, 1]} : vector<4x2xf32> to vector<1x2xf32>
      %328 = vector.broadcast %326 : vector<2x1xf32> to vector<2x2xf32>
      %329 = vector.broadcast %327 : vector<1x2xf32> to vector<2x2xf32>
      %330 = arith.mulf %328, %329 : vector<2x2xf32>
      %331 = arith.addf %325, %330 : vector<2x2xf32>
      %332 = vector.extract_strided_slice %304 {offsets = [0, 3], sizes = [2, 1], strides = [1, 1]} : vector<2x4xf32> to vector<2x1xf32>
      %333 = vector.extract_strided_slice %314 {offsets = [3, 0], sizes = [1, 2], strides = [1, 1]} : vector<4x2xf32> to vector<1x2xf32>
      %334 = vector.broadcast %332 : vector<2x1xf32> to vector<2x2xf32>
      %335 = vector.broadcast %333 : vector<1x2xf32> to vector<2x2xf32>
      %336 = arith.mulf %334, %335 : vector<2x2xf32>
      %337 = arith.addf %331, %336 : vector<2x2xf32>
      %338 = vector.broadcast %305 : vector<2x1xf32> to vector<2x2xf32>
      %339 = arith.addf %337, %338 : vector<2x2xf32>
      %cst_94 = arith.constant 0.000000e+00 : f32
      %340 = vector.broadcast %cst_94 : f32 to vector<2x2xf32>
      %341 = arith.maximumf %339, %340 : vector<2x2xf32>
      %342 = vector.extract_strided_slice %306 {offsets = [0, 0], sizes = [4, 1], strides = [1, 1]} : vector<4x2xf32> to vector<4x1xf32>
      %343 = vector.extract_strided_slice %341 {offsets = [0, 0], sizes = [1, 2], strides = [1, 1]} : vector<2x2xf32> to vector<1x2xf32>
      %344 = vector.broadcast %342 : vector<4x1xf32> to vector<4x2xf32>
      %345 = vector.broadcast %343 : vector<1x2xf32> to vector<4x2xf32>
      %346 = arith.mulf %344, %345 : vector<4x2xf32>
      %347 = vector.extract_strided_slice %306 {offsets = [0, 1], sizes = [4, 1], strides = [1, 1]} : vector<4x2xf32> to vector<4x1xf32>
      %348 = vector.extract_strided_slice %341 {offsets = [1, 0], sizes = [1, 2], strides = [1, 1]} : vector<2x2xf32> to vector<1x2xf32>
      %349 = vector.broadcast %347 : vector<4x1xf32> to vector<4x2xf32>
      %350 = vector.broadcast %348 : vector<1x2xf32> to vector<4x2xf32>
      %351 = arith.mulf %349, %350 : vector<4x2xf32>
      %352 = arith.addf %346, %351 : vector<4x2xf32>
      %353 = vector.broadcast %307 : vector<4x1xf32> to vector<4x2xf32>
      %354 = arith.addf %352, %353 : vector<4x2xf32>
      %355 = vector.extract_strided_slice %354 {offsets = [0, 0], sizes = [4, 1], strides = [1, 1]} : vector<4x2xf32> to vector<4x1xf32>
      %356 = vector.extract_strided_slice %354 {offsets = [0, 1], sizes = [4, 1], strides = [1, 1]} : vector<4x2xf32> to vector<4x1xf32>
      %357 = arith.addf %355, %356 : vector<4x1xf32>
      %cst_95 = arith.constant 5.000000e-01 : f32
      %358 = vector.broadcast %cst_95 : f32 to vector<4x1xf32>
      %359 = arith.mulf %358, %357 : vector<4x1xf32>
      %360 = math.tanh %359 : vector<4x1xf32>
      %cst_96 = arith.constant 1.000000e+00 : f32
      %361 = vector.broadcast %cst_96 : f32 to vector<4x1xf32>
      %362 = arith.addf %360, %361 : vector<4x1xf32>
      %cst_97 = arith.constant 5.000000e-01 : f32
      %363 = vector.broadcast %cst_97 : f32 to vector<4x1xf32>
      %364 = arith.mulf %363, %362 : vector<4x1xf32>
      %365 = vector.broadcast %364 : vector<4x1xf32> to vector<4x2xf32>
      %366 = arith.mulf %303, %365 : vector<4x2xf32>
      %cst_98 = arith.constant dense<0.000000e+00> : vector<4x4xf32>
      %367 = tpu.matmul %366, %303, %cst_98 {dimension_numbers = #tpu.dot_dimension_numbers<[1], [1], [0], [0], [0, 0, 1, 0], [], []>} : vector<4x2xf32>, vector<4x2xf32>, vector<4x4xf32> -> vector<4x4xf32>
      %368 = vector.extract_strided_slice %367 {offsets = [0, 0], sizes = [1, 4], strides = [1, 1]} : vector<4x4xf32> to vector<1x4xf32>
      %369 = vector.extract_strided_slice %367 {offsets = [1, 0], sizes = [1, 4], strides = [1, 1]} : vector<4x4xf32> to vector<1x4xf32>
      %370 = vector.extract_strided_slice %367 {offsets = [2, 0], sizes = [1, 4], strides = [1, 1]} : vector<4x4xf32> to vector<1x4xf32>
      %371 = vector.extract_strided_slice %367 {offsets = [3, 0], sizes = [1, 4], strides = [1, 1]} : vector<4x4xf32> to vector<1x4xf32>
      %372 = tpu.concatenate %368, %369, %370, %371 in 1 : vector<1x4xf32>, vector<1x4xf32>, vector<1x4xf32>, vector<1x4xf32> -> vector<1x16xf32>
      %c240 = arith.constant 240 : index
      %c0_99 = arith.constant 0 : index
      %373 = vector.load %arg2[%c240, %c0_99] : memref<296x32xf32, #tpu.memory_space<vmem>>, vector<16x4xf32>
      %cst_100 = arith.constant dense<0.000000e+00> : vector<1x4xf32>
      %374 = tpu.matmul %372, %373, %cst_100 {dimension_numbers = #tpu.dot_dimension_numbers<[1], [0], [0], [1], [0, 0, 1, 1], [], []>} : vector<1x16xf32>, vector<16x4xf32>, vector<1x4xf32> -> vector<1x4xf32>
      %c256 = arith.constant 256 : index
      %c0_101 = arith.constant 0 : index
      %375 = vector.load %arg2[%c256, %c0_101] : memref<296x32xf32, #tpu.memory_space<vmem>>, vector<1x4xf32>
      %376 = arith.addf %374, %375 : vector<1x4xf32>
      %cst_102 = arith.constant 0.000000e+00 : f32
      %377 = vector.broadcast %cst_102 : f32 to vector<1x4xf32>
      %378 = arith.maximumf %376, %377 : vector<1x4xf32>
      %379 = tpu.concatenate %300, %378 in 1 : vector<1x4xf32>, vector<1x4xf32> -> vector<1x8xf32>
      %c264 = arith.constant 264 : index
      %c0_103 = arith.constant 0 : index
      %380 = vector.load %arg2[%c264, %c0_103] : memref<296x32xf32, #tpu.memory_space<vmem>>, vector<8x4xf32>
      %cst_104 = arith.constant dense<0.000000e+00> : vector<1x4xf32>
      %381 = tpu.matmul %379, %380, %cst_104 {dimension_numbers = #tpu.dot_dimension_numbers<[1], [0], [0], [1], [0, 0, 1, 1], [], []>} : vector<1x8xf32>, vector<8x4xf32>, vector<1x4xf32> -> vector<1x4xf32>
      %c272 = arith.constant 272 : index
      %c0_105 = arith.constant 0 : index
      %382 = vector.load %arg2[%c272, %c0_105] : memref<296x32xf32, #tpu.memory_space<vmem>>, vector<1x4xf32>
      %383 = arith.addf %381, %382 : vector<1x4xf32>
      %cst_106 = arith.constant 0.000000e+00 : f32
      %384 = vector.broadcast %cst_106 : f32 to vector<1x4xf32>
      %385 = arith.maximumf %383, %384 : vector<1x4xf32>
      %386 = tpu.concatenate %211, %385 in 1 : vector<1x4xf32>, vector<1x4xf32> -> vector<1x8xf32>
      %c280 = arith.constant 280 : index
      %c0_107 = arith.constant 0 : index
      %387 = vector.load %arg2[%c280, %c0_107] : memref<296x32xf32, #tpu.memory_space<vmem>>, vector<8x4xf32>
      %cst_108 = arith.constant dense<0.000000e+00> : vector<1x4xf32>
      %388 = tpu.matmul %386, %387, %cst_108 {dimension_numbers = #tpu.dot_dimension_numbers<[1], [0], [0], [1], [0, 0, 1, 1], [], []>} : vector<1x8xf32>, vector<8x4xf32>, vector<1x4xf32> -> vector<1x4xf32>
      %c288 = arith.constant 288 : index
      %c0_109 = arith.constant 0 : index
      %389 = vector.load %arg2[%c288, %c0_109] : memref<296x32xf32, #tpu.memory_space<vmem>>, vector<1x4xf32>
      %390 = arith.addf %388, %389 : vector<1x4xf32>
      %cst_110 = arith.constant 0.000000e+00 : f32
      %391 = vector.broadcast %cst_110 : f32 to vector<1x4xf32>
      %392 = arith.maximumf %390, %391 : vector<1x4xf32>
      %393 = arith.index_cast %arg5 : i32 to index
      %c0_111 = arith.constant 0 : index
      %394 = vector.load %arg3[%393, %c0_111] : memref<8x8xf32, #tpu.memory_space<vmem>>, vector<1x4xf32>
      tpu.vector_store %arg3[%393, %c0_111], %378 {strides = array<i32>} : memref<8x8xf32, #tpu.memory_space<vmem>>, vector<1x4xf32>,
      %395 = arith.index_cast %arg5 : i32 to index
      %c4 = arith.constant 4 : index
      %396 = vector.load %arg3[%395, %c4] : memref<8x8xf32, #tpu.memory_space<vmem>>, vector<1x4xf32>
      tpu.vector_store %arg3[%395, %c4], %392 {strides = array<i32>} : memref<8x8xf32, #tpu.memory_space<vmem>>, vector<1x4xf32>,
      scf.yield %392 : vector<1x4xf32>
    }
    %c8_i32_16 = arith.constant 8 : i32
    return
  }
  func.func @transform_0(%arg0: i32) -> (i32, i32) {
    %c0_i32 = arith.constant 0 : i32
    %c0_i32_0 = arith.constant 0 : i32
    %c0_i32_1 = arith.constant 0 : i32
    return %c0_i32, %c0_i32_0 : i32, i32
  }
  func.func @transform_1(%arg0: i32) -> (i32, i32) {
    %c0_i32 = arith.constant 0 : i32
    %c0_i32_0 = arith.constant 0 : i32
    %c0_i32_1 = arith.constant 0 : i32
    return %c0_i32, %c0_i32_0 : i32, i32
  }
  func.func @transform_2(%arg0: i32) -> (i32, i32) {
    %c0_i32 = arith.constant 0 : i32
    %c0_i32_0 = arith.constant 0 : i32
    %c0_i32_1 = arith.constant 0 : i32
    return %c0_i32, %c0_i32_0 : i32, i32
  }
}

</mosaic_0001>

<llo_original>
// kernel: kt_rollout.1
$region0: #{kt_rollout.1}
  #allocation0 [shape = 'u32[]', space=smem, size = 0x4, offset = 0x4, fixed_abs, tag = 'smem constant byte address 0x4 - core index']
  #allocation1 [shape = 'u32[144,128]{1,0:T(1,128)}', space=vmem, size = 0x12000, scoped, tag = 'internal scratch']
  #allocation2 [shape = 'f32[8,24]{1,0:T(8,128)}', space=vmem, size = 0x1000, scoped, tag = 'scratch operand']
  %s0 = inlined_call_operand.vmem [shape: f32[8,2], index: 0, kind: input, shape index: {}]
  %s1 = inlined_call_operand.vmem [shape: f32[296,32], index: 1, kind: input, shape index: {}]
  %s2 = inlined_call_operand.vmem [shape: f32[8,8], index: 2, kind: output, shape index: {}]
  %s3 = sld [smem:[#allocation0]]
  $region25: #{kt_rollout.1} parent=0
    _
  %s5 = ssub.s32 1, %s3
  %s6 = scalar_select 0, %s5, %s3
  // Predicated region
  $region2: #{kt_rollout.1} parent=0 // pred_check
    _
  $region3: #{kt_rollout.1} parent=0 // pred_check_branch
    %8 = sbr.rel (0) target = $region5
  $region4: #{kt_rollout.1} parent=0 // pred_region
    _
  $region5: #{kt_rollout.1} parent=0 // pred_fallthru
    _
  // Predicated region
  $region6: #{kt_rollout.1} parent=0 // pred_check
    _
  $region7: #{kt_rollout.1} parent=0 // pred_check_branch
    %10 = sbr.rel (0) target = $region9
  $region8: #{kt_rollout.1} parent=0 // pred_region
    _
  $region9: #{kt_rollout.1} parent=0 // pred_fallthru
    _
  %v11 = vld [vmem:[%s0] sm:$0xff]
  %v12 = vld [vmem:[%s1] sm:$0x3]
  %14 = vset.pattern.permute.xlu0 0
  %15 = vperm.xlu0 %14, %v11
  %v16 = vpop.permute.xlu0 %15
  %v18 = vlaneseq
  %v19 = vshrl.u32 %v18, 7
  %v20 = vsub.s32 0, %v19
  %v21 = vrot.slane %v12, %v20
  %v22 = vmul.f32 %v16, %v21
  %23 = vset.pattern.permute.xlu0 1
  %24 = vperm.xlu0 %23, %v11
  %v25 = vpop.permute.xlu0 %24
  %v27 = vlaneseq
  %v28 = vshrl.u32 %v27, 7
  %v29 = vsub.s32 1, %v28
  %v30 = vrot.slane %v12, %v29
  %v31 = vmul.f32 %v25, %v30
  %v32 = vadd.f32 %v22, %v31
  %v33 = vld [vmem:[%s1 + $0x8] sm:$0x1]
  %v34 = vlaneseq
  %v35 = vshrl.u32 %v34, 7
  %v36 = vsub.s32 0, %v35
  %v37 = vrot.slane %v33, %v36
  %v38 = vadd.f32 %v32, %v37
  %v39 = vmax.f32 %v38, 0.0
  %vm40 = vcmask 195584
  %41 = vst.msk [vmem:[#allocation2] sm:$0xff] %vm40, %v39
  %v42 = vld [vmem:[%s1 + $0x30] sm:$0xf]
  %v43 = vld [vmem:[%s1 + $0x38] sm:$0xf]
  %v44 = vld [vmem:[%s1 + $0x50] sm:$0xf]
  %v45 = vld [vmem:[%s1 + $0x58] sm:$0xf]
  %v46 = vld [vmem:[%s1 + $0x60] sm:$0xf]
  %v47 = vld [vmem:[%s1 + $0x68] sm:$0xf]
  %v48 = vld [vmem:[%s1 + $0xa0] sm:$0xff]
  %v49 = vld [vmem:[%s1 + $0xa8] sm:$0x1]
  %v50 = vld [vmem:[%s1 + $0x80] sm:$0xff]
  %v51 = vld [vmem:[%s1 + $0x88] sm:$0xff]
  %v52 = vld [vmem:[%s1 + $0x90] sm:$0xff]
  %v53 = vld [vmem:[%s1 + $0x98] sm:$0xff]
  loop: start=0, step=1, limit=8
  $region10: #{kt_rollout.1} parent=0 // loop_pre_header
    _
  $region11: #{kt_rollout.1} parent=0 // loop_header
    %s55 = sphi 0, %s59
    %p56 = scmp.ge.s32.totalorder %s55, 8
    %v60 = vphi 0.0, %v1340
  $region12: #{kt_rollout.1} parent=0 // loop_header_branch
    %58 = sbr.rel (%p56) target = $region16
  $region13: #{kt_rollout.1} parent=0 // loop_body
    %s61 = scalar_lea.vmem [#allocation2], %s55
    %v62 = vld [vmem:[%s61] sm:$0x1]
    %64 = vrot.lane.b32.xlu0 %v62, 4
    %v65 = vpop.permute.xlu0 %64
    %68 = vrot.lane.b32.xlu0 %v60, 28
    %v69 = vpop.permute.xlu0 %68
    %vm71 = vcmask 31744
    %v72 = vsel %vm71, 0.0, %v65
    %vm73 = vcmask 228352
    %v74 = vsel %vm73, %v72, %v69
    %v75 = vld [vmem:[%s1 + $0x10] sm:$0xf]
    %v76 = vld [vmem:[%s1 + $0x18] sm:$0xf]
    %78 = vset.pattern.permute.xlu0 0
    %79 = vperm.xlu0 %78, %v75
    %v80 = vpop.permute.xlu0 %79
    %v82 = vlaneseq
    %v83 = vshrl.u32 %v82, 7
    %v84 = vsub.s32 0, %v83
    %v85 = vrot.slane %v74, %v84
    %v86 = vmul.f32 %v80, %v85
    %88 = vset.pattern.permute.xlu0 0
    %89 = vperm.xlu0 %88, %v76
    %v90 = vpop.permute.xlu0 %89
    %v92 = vadd.f32 %v86, %v90
    %v93 = vmul.f32 %v92, 0.5
    %v94 = vtanh.pop %v93
    %v95 = vadd.f32 %v94, 1.0
    %v96 = vmul.f32 %v95, 0.5
    %v97 = vmul.f32 %v92, %v96
    %99 = vrot.lane.b32.xlu0 %v97, 1
    %v100 = vpop.permute.xlu0 %99
    %vm102 = vcmask 7168
    %v103 = vsel %vm102, 0.0, %v100
    %104 = vrot.lane.b32.xlu0 %v97, 127
    %v105 = vpop.permute.xlu0 %104
    %vm107 = vcmask 252928
    %v108 = vsel %vm107, %v105, 0.0
    %v109 = vrot.slane %v97, 4
    %vm111 = vcmask 1043456
    %v112 = vsel %vm111, %v103, %v109
    %114 = vset.pattern.permute.xlu0 0
    %115 = vperm.xlu0 %114, %v43
    %v116 = vpop.permute.xlu0 %115
    %vm118 = vcmask 97280
    %v120 = vsel %vm118, %v42, 0
    %v123 = vsel %vm111, %v108, 0
    %125 = vmatprep.subr.mxu0 0.0
    %126 = vmatpush1.msra.mxu0 %v112
    %127 = vmatprep.subr.mxu0 0.0
    %128 = vmatpush1.msra.mxu0 %v123
    %129 = vmatprep.subr.mxu0 0.0
    %130 = vmatpush1.msra.mxu0 0.0
    %131 = vmatprep.subr.mxu0 0.0
    %132 = vmatpush1.msra.mxu0 0.0
    %133 = vmatprep.subr.mxu0 0.0
    %134 = vmatpush1.msra.mxu0 0.0
    %135 = vmatprep.subr.mxu0 0.0
    %136 = vmatpush1.msra.mxu0 0.0
    %137 = vmatprep.subr.mxu0 0.0
    %138 = vmatpush1.msra.mxu0 0.0
    %139 = vmatprep.subr.mxu0 0.0
    %140 = vmatpush1.msra.mxu0 0.0
    %141 = vmatprep.subr.mxu0 0.0
    %142 = vmatpush1.msra.mxu0 0.0
    %143 = vmatprep.subr.mxu0 0.0
    %144 = vmatpush1.msra.mxu0 0.0
    %145 = vmatprep.subr.mxu0 0.0
    %146 = vmatpush1.msra.mxu0 0.0
    %147 = vmatprep.subr.mxu0 0.0
    %148 = vmatpush1.msra.mxu0 0.0
    %149 = vmatprep.subr.mxu0 0.0
    %150 = vmatpush1.msra.mxu0 0.0
    %151 = vmatprep.subr.mxu0 0.0
    %152 = vmatpush1.msra.mxu0 0.0
    %153 = vmatprep.subr.mxu0 0.0
    %154 = vmatpush1.msra.mxu0 0.0
    %155 = vmatprep.subr.mxu0 0.0
    %156 = vmatpush1.msra.mxu0 0.0
    %157 = vmatprep.subr.mxu0 0.0
    %158 = vmatpush1.msra.mxu0 0.0
    %159 = vmatprep.subr.mxu0 0.0
    %160 = vmatpush1.msra.mxu0 0.0
    %161 = vmatprep.subr.mxu0 0.0
    %162 = vmatpush1.msra.mxu0 0.0
    %163 = vmatprep.subr.mxu0 0.0
    %164 = vmatpush1.msra.mxu0 0.0
    %165 = vmatprep.subr.mxu0 0.0
    %166 = vmatpush1.msra.mxu0 0.0
    %167 = vmatprep.subr.mxu0 0.0
    %168 = vmatpush1.msra.mxu0 0.0
    %169 = vmatprep.subr.mxu0 0.0
    %170 = vmatpush1.msra.mxu0 0.0
    %171 = vmatprep.subr.mxu0 0.0
    %172 = vmatpush1.msra.mxu0 0.0
    %173 = vmatprep.subr.mxu0 0.0
    %174 = vmatpush1.msra.mxu0 0.0
    %175 = vmatprep.subr.mxu0 0.0
    %176 = vmatpush1.msra.mxu0 0.0
    %177 = vmatprep.subr.mxu0 0.0
    %178 = vmatpush1.msra.mxu0 0.0
    %179 = vmatprep.subr.mxu0 0.0
    %180 = vmatpush1.msra.mxu0 0.0
    %181 = vmatprep.subr.mxu0 0.0
    %182 = vmatpush1.msra.mxu0 0.0
    %183 = vmatprep.subr.mxu0 0.0
    %184 = vmatpush1.msra.mxu0 0.0
    %185 = vmatprep.subr.mxu0 0.0
    %186 = vmatpush1.msra.mxu0 0.0
    %187 = vmatprep.subr.mxu0 0.0
    %188 = vmatpush1.msra.mxu0 0.0
    %189 = vmatprep.mubr.f32.mxu0 0.0
    %190 = vmatmul.mubr.f32.gmra.mrb[0].mxu0 %v120
    %v191 = vpop.f32.mrb[0].mxu0
    %v192 = vadd.f32 %v116, %v191
    %v193 = vpop.f32.mrb[0].mxu0
    %194 = vdwg.mxu0
    %v195 = vmul.f32 %v192, 0.5
    %v196 = vtanh.pop %v195
    %v197 = vadd.f32 %v196, 1.0
    %v198 = vmul.f32 %v197, 0.5
    %v199 = vmul.f32 %v192, %v198
    %v200 = vld [vmem:[%s1 + $0x40] sm:$0xf]
    %v201 = vld [vmem:[%s1 + $0x48] sm:$0xf]
    %203 = vset.pattern.permute.xlu0 0
    %204 = vperm.xlu0 %203, %v200
    %v205 = vpop.permute.xlu0 %204
    %v207 = vlaneseq
    %v208 = vshrl.u32 %v207, 7
    %v209 = vsub.s32 0, %v208
    %v210 = vrot.slane %v199, %v209
    %v211 = vmul.f32 %v205, %v210
    %212 = vset.pattern.permute.xlu0 1
    %213 = vperm.xlu0 %212, %v200
    %v214 = vpop.permute.xlu0 %213
    %v216 = vlaneseq
    %v217 = vshrl.u32 %v216, 7
    %v218 = vsub.s32 1, %v217
    %v219 = vrot.slane %v199, %v218
    %v220 = vmul.f32 %v214, %v219
    %v221 = vadd.f32 %v211, %v220
    %222 = vset.pattern.permute.xlu0 2
    %223 = vperm.xlu0 %222, %v200
    %v224 = vpop.permute.xlu0 %223
    %v226 = vlaneseq
    %v227 = vshrl.u32 %v226, 7
    %v228 = vsub.s32 2, %v227
    %v229 = vrot.slane %v199, %v228
    %v230 = vmul.f32 %v224, %v229
    %v231 = vadd.f32 %v221, %v230
    %232 = vset.pattern.permute.xlu0 3
    %233 = vperm.xlu0 %232, %v200
    %v234 = vpop.permute.xlu0 %233
    %v236 = vlaneseq
    %v237 = vshrl.u32 %v236, 7
    %v238 = vsub.s32 3, %v237
    %v239 = vrot.slane %v199, %v238
    %v240 = vmul.f32 %v234, %v239
    %v241 = vadd.f32 %v231, %v240
    %243 = vset.pattern.permute.xlu0 0
    %244 = vperm.xlu0 %243, %v201
    %v245 = vpop.permute.xlu0 %244
    %v247 = vadd.f32 %v241, %v245
    %v248 = vmul.f32 %v247, 0.5
    %v249 = vtanh.pop %v248
    %v250 = vadd.f32 %v249, 1.0
    %v251 = vmul.f32 %v250, 0.5
    %v252 = vmul.f32 %v247, %v251
    %254 = vrot.lane.b32.xlu0 %v252, 127
    %v255 = vpop.permute.xlu0 %254
    %v257 = vsel %vm107, %v255, -1e+30
    %258 = vrot.lane.b32.xlu0 %v252, 1
    %v259 = vpop.permute.xlu0 %258
    %v261 = vsel %vm102, -1e+30, %v259
    %v262 = vmax.f32 %v257, %v261
    %v263 = vmax.f32 %v252, %v262
    %264 = vrot.lane.b32.xlu0 %v252, 126
    %v265 = vpop.permute.xlu0 %264
    %vm267 = vcmask 244736
    %v268 = vsel %vm267, %v265, -1e+30
    %269 = vrot.lane.b32.xlu0 %v252, 2
    %v270 = vpop.permute.xlu0 %269
    %vm272 = vcmask 15360
    %v273 = vsel %vm272, -1e+30, %v270
    %v274 = vmax.f32 %v268, %v273
    %v275 = vmax.f32 %v263, %v274
    %277 = vrot.lane.b32.xlu0 %v275, 127
    %v278 = vpop.permute.xlu0 %277
    %v280 = vsel %vm107, %v278, -1e+30
    %281 = vrot.lane.b32.xlu0 %v275, 1
    %v282 = vpop.permute.xlu0 %281
    %v284 = vsel %vm102, -1e+30, %v282
    %v285 = vmax.f32 %v280, %v284
    %v286 = vmax.f32 %v275, %v285
    %287 = vrot.lane.b32.xlu0 %v275, 126
    %v288 = vpop.permute.xlu0 %287
    %v290 = vsel %vm267, %v288, -1e+30
    %291 = vrot.lane.b32.xlu0 %v275, 2
    %v292 = vpop.permute.xlu0 %291
    %v294 = vsel %vm272, -1e+30, %v292
    %v295 = vmax.f32 %v290, %v294
    %v296 = vmax.f32 %v286, %v295
    %298 = vrot.lane.b32.xlu0 %v296, 127
    %v299 = vpop.permute.xlu0 %298
    %v301 = vsel %vm107, %v299, -1e+30
    %302 = vrot.lane.b32.xlu0 %v296, 1
    %v303 = vpop.permute.xlu0 %302
    %v305 = vsel %vm102, -1e+30, %v303
    %v306 = vmax.f32 %v301, %v305
    %v307 = vmax.f32 %v296, %v306
    %308 = vrot.lane.b32.xlu0 %v296, 126
    %v309 = vpop.permute.xlu0 %308
    %v311 = vsel %vm267, %v309, -1e+30
    %312 = vrot.lane.b32.xlu0 %v296, 2
    %v313 = vpop.permute.xlu0 %312
    %v315 = vsel %vm272, -1e+30, %v313
    %v316 = vmax.f32 %v311, %v315
    %v317 = vmax.f32 %v307, %v316
    %v318 = vrot.slane %v275, 4
    %v321 = vrot.slane %v317, 4
    %v323 = vsel %vm111, %v252, %v318
    %v324 = vsel %vm111, %v296, %v321
    %326 = vset.pattern.permute.xlu0 0
    %327 = vperm.xlu0 %326, %v45
    %v328 = vpop.permute.xlu0 %327
    %vm330 = vcmask 130048
    %v332 = vsel %vm330, %v44, 0
    %334 = vmatprep.subr.mxu0 0.0
    %335 = vmatpush1.msra.mxu0 %v323
    %336 = vmatprep.subr.mxu0 0.0
    %337 = vmatpush1.msra.mxu0 %v324
    %338 = vmatprep.subr.mxu0 0.0
    %339 = vmatpush1.msra.mxu0 0.0
    %340 = vmatprep.subr.mxu0 0.0
    %341 = vmatpush1.msra.mxu0 0.0
    %342 = vmatprep.subr.mxu0 0.0
    %343 = vmatpush1.msra.mxu0 0.0
    %344 = vmatprep.subr.mxu0 0.0
    %345 = vmatpush1.msra.mxu0 0.0
    %346 = vmatprep.subr.mxu0 0.0
    %347 = vmatpush1.msra.mxu0 0.0
    %348 = vmatprep.subr.mxu0 0.0
    %349 = vmatpush1.msra.mxu0 0.0
    %350 = vmatprep.subr.mxu0 0.0
    %351 = vmatpush1.msra.mxu0 0.0
    %352 = vmatprep.subr.mxu0 0.0
    %353 = vmatpush1.msra.mxu0 0.0
    %354 = vmatprep.subr.mxu0 0.0
    %355 = vmatpush1.msra.mxu0 0.0
    %356 = vmatprep.subr.mxu0 0.0
    %357 = vmatpush1.msra.mxu0 0.0
    %358 = vmatprep.subr.mxu0 0.0
    %359 = vmatpush1.msra.mxu0 0.0
    %360 = vmatprep.subr.mxu0 0.0
    %361 = vmatpush1.msra.mxu0 0.0
    %362 = vmatprep.subr.mxu0 0.0
    %363 = vmatpush1.msra.mxu0 0.0
    %364 = vmatprep.subr.mxu0 0.0
    %365 = vmatpush1.msra.mxu0 0.0
    %366 = vmatprep.subr.mxu0 0.0
    %367 = vmatpush1.msra.mxu0 0.0
    %368 = vmatprep.subr.mxu0 0.0
    %369 = vmatpush1.msra.mxu0 0.0
    %370 = vmatprep.subr.mxu0 0.0
    %371 = vmatpush1.msra.mxu0 0.0
    %372 = vmatprep.subr.mxu0 0.0
    %373 = vmatpush1.msra.mxu0 0.0
    %374 = vmatprep.subr.mxu0 0.0
    %375 = vmatpush1.msra.mxu0 0.0
    %376 = vmatprep.subr.mxu0 0.0
    %377 = vmatpush1.msra.mxu0 0.0
    %378 = vmatprep.subr.mxu0 0.0
    %379 = vmatpush1.msra.mxu0 0.0
    %380 = vmatprep.subr.mxu0 0.0
    %381 = vmatpush1.msra.mxu0 0.0
    %382 = vmatprep.subr.mxu0 0.0
    %383 = vmatpush1.msra.mxu0 0.0
    %384 = vmatprep.subr.mxu0 0.0
    %385 = vmatpush1.msra.mxu0 0.0
    %386 = vmatprep.subr.mxu0 0.0
    %387 = vmatpush1.msra.mxu0 0.0
    %388 = vmatprep.subr.mxu0 0.0
    %389 = vmatpush1.msra.mxu0 0.0
    %390 = vmatprep.subr.mxu0 0.0
    %391 = vmatpush1.msra.mxu0 0.0
    %392 = vmatprep.subr.mxu0 0.0
    %393 = vmatpush1.msra.mxu0 0.0
    %394 = vmatprep.subr.mxu0 0.0
    %395 = vmatpush1.msra.mxu0 0.0
    %396 = vmatprep.subr.mxu0 0.0
    %397 = vmatpush1.msra.mxu0 0.0
    %398 = vmatprep.mubr.f32.mxu0 0.0
    %399 = vmatmul.mubr.f32.gmra.mrb[0].mxu0 %v332
    %v400 = vpop.f32.mrb[0].mxu0
    %v401 = vadd.f32 %v328, %v400
    %v402 = vpop.f32.mrb[0].mxu0
    %403 = vdwg.mxu0
    %v404 = vmul.f32 %v401, 0.5
    %v405 = vtanh.pop %v404
    %v406 = vadd.f32 %v405, 1.0
    %v407 = vmul.f32 %v406, 0.5
    %v408 = vmul.f32 %v401, %v407
    %410 = vrot.lane.b32.xlu0 %v408, 1
    %v411 = vpop.permute.xlu0 %410
    %v413 = vsel %vm102, 0.0, %v411
    %414 = vrot.lane.b32.xlu0 %v408, 127
    %v415 = vpop.permute.xlu0 %414
    %v417 = vsel %vm107, %v415, 0.0
    %v418 = vrot.slane %v408, 4
    %v420 = vsel %vm111, %v413, %v418
    %422 = vset.pattern.permute.xlu0 0
    %423 = vperm.xlu0 %422, %v47
    %v424 = vpop.permute.xlu0 %423
    %v427 = vsel %vm118, %v46, 0
    %v430 = vsel %vm111, %v417, 0
    %432 = vmatprep.subr.mxu0 0.0
    %433 = vmatpush1.msra.mxu0 %v420
    %434 = vmatprep.subr.mxu0 0.0
    %435 = vmatpush1.msra.mxu0 %v430
    %436 = vmatprep.subr.mxu0 0.0
    %437 = vmatpush1.msra.mxu0 0.0
    %438 = vmatprep.subr.mxu0 0.0
    %439 = vmatpush1.msra.mxu0 0.0
    %440 = vmatprep.subr.mxu0 0.0
    %441 = vmatpush1.msra.mxu0 0.0
    %442 = vmatprep.subr.mxu0 0.0
    %443 = vmatpush1.msra.mxu0 0.0
    %444 = vmatprep.subr.mxu0 0.0
    %445 = vmatpush1.msra.mxu0 0.0
    %446 = vmatprep.subr.mxu0 0.0
    %447 = vmatpush1.msra.mxu0 0.0
    %448 = vmatprep.subr.mxu0 0.0
    %449 = vmatpush1.msra.mxu0 0.0
    %450 = vmatprep.subr.mxu0 0.0
    %451 = vmatpush1.msra.mxu0 0.0
    %452 = vmatprep.subr.mxu0 0.0
    %453 = vmatpush1.msra.mxu0 0.0
    %454 = vmatprep.subr.mxu0 0.0
    %455 = vmatpush1.msra.mxu0 0.0
    %456 = vmatprep.subr.mxu0 0.0
    %457 = vmatpush1.msra.mxu0 0.0
    %458 = vmatprep.subr.mxu0 0.0
    %459 = vmatpush1.msra.mxu0 0.0
    %460 = vmatprep.subr.mxu0 0.0
    %461 = vmatpush1.msra.mxu0 0.0
    %462 = vmatprep.subr.mxu0 0.0
    %463 = vmatpush1.msra.mxu0 0.0
    %464 = vmatprep.subr.mxu0 0.0
    %465 = vmatpush1.msra.mxu0 0.0
    %466 = vmatprep.subr.mxu0 0.0
    %467 = vmatpush1.msra.mxu0 0.0
    %468 = vmatprep.subr.mxu0 0.0
    %469 = vmatpush1.msra.mxu0 0.0
    %470 = vmatprep.subr.mxu0 0.0
    %471 = vmatpush1.msra.mxu0 0.0
    %472 = vmatprep.subr.mxu0 0.0
    %473 = vmatpush1.msra.mxu0 0.0
    %474 = vmatprep.subr.mxu0 0.0
    %475 = vmatpush1.msra.mxu0 0.0
    %476 = vmatprep.subr.mxu0 0.0
    %477 = vmatpush1.msra.mxu0 0.0
    %478 = vmatprep.subr.mxu0 0.0
    %479 = vmatpush1.msra.mxu0 0.0
    %480 = vmatprep.subr.mxu0 0.0
    %481 = vmatpush1.msra.mxu0 0.0
    %482 = vmatprep.subr.mxu0 0.0
    %483 = vmatpush1.msra.mxu0 0.0
    %484 = vmatprep.subr.mxu0 0.0
    %485 = vmatpush1.msra.mxu0 0.0
    %486 = vmatprep.subr.mxu0 0.0
    %487 = vmatpush1.msra.mxu0 0.0
    %488 = vmatprep.subr.mxu0 0.0
    %489 = vmatpush1.msra.mxu0 0.0
    %490 = vmatprep.subr.mxu0 0.0
    %491 = vmatpush1.msra.mxu0 0.0
    %492 = vmatprep.subr.mxu0 0.0
    %493 = vmatpush1.msra.mxu0 0.0
    %494 = vmatprep.subr.mxu0 0.0
    %495 = vmatpush1.msra.mxu0 0.0
    %496 = vmatprep.mubr.f32.mxu0 0.0
    %497 = vmatmul.mubr.f32.gmra.mrb[0].mxu0 %v427
    %v498 = vpop.f32.mrb[0].mxu0
    %v499 = vadd.f32 %v424, %v498
    %v500 = vpop.f32.mrb[0].mxu0
    %501 = vdwg.mxu0
    %v502 = vmul.f32 %v499, 0.5
    %v503 = vtanh.pop %v502
    %v504 = vadd.f32 %v503, 1.0
    %v505 = vmul.f32 %v504, 0.5
    %v506 = vmul.f32 %v499, %v505
    %v507 = vld [vmem:[%s1 + $0x20] sm:$0xf]
    %v508 = vld [vmem:[%s1 + $0x28] sm:$0xf]
    %510 = vset.pattern.permute.xlu0 0
    %511 = vperm.xlu0 %510, %v507
    %v512 = vpop.permute.xlu0 %511
    %v514 = vmul.f32 %v512, %v85
    %516 = vset.pattern.permute.xlu0 0
    %517 = vperm.xlu0 %516, %v508
    %v518 = vpop.permute.xlu0 %517
    %v520 = vadd.f32 %v514, %v518
    %v521 = vmul.f32 %v520, 0.5
    %v522 = vtanh.pop %v521
    %v523 = vadd.f32 %v522, 1.0
    %v524 = vmul.f32 %v523, 0.5
    %v525 = vmul.f32 %v520, %v524
    %v527 = vrot.slane %v525, 4
    %v529 = vsel %vm111, %v506, %v527
    %v530 = vld [vmem:[%s1 + $0x70] sm:$0x1]
    %v531 = vld [vmem:[%s1 + $0x78] sm:$0x1]
    %533 = vset.pattern.permute.xlu0 0
    %534 = vperm.xlu0 %533, %v531
    %v535 = vpop.permute.xlu0 %534
    %vm537 = vcmask 64512
    %v539 = vsel %vm537, %v530, 0
    %541 = vmatprep.subr.mxu0 0.0
    %542 = vmatpush1.msra.mxu0 %v529
    %543 = vmatprep.subr.mxu0 0.0
    %544 = vmatpush1.msra.mxu0 0.0
    %545 = vmatprep.subr.mxu0 0.0
    %546 = vmatpush1.msra.mxu0 0.0
    %547 = vmatprep.subr.mxu0 0.0
    %548 = vmatpush1.msra.mxu0 0.0
    %549 = vmatprep.subr.mxu0 0.0
    %550 = vmatpush1.msra.mxu0 0.0
    %551 = vmatprep.subr.mxu0 0.0
    %552 = vmatpush1.msra.mxu0 0.0
    %553 = vmatprep.subr.mxu0 0.0
    %554 = vmatpush1.msra.mxu0 0.0
    %555 = vmatprep.subr.mxu0 0.0
    %556 = vmatpush1.msra.mxu0 0.0
    %557 = vmatprep.subr.mxu0 0.0
    %558 = vmatpush1.msra.mxu0 0.0
    %559 = vmatprep.subr.mxu0 0.0
    %560 = vmatpush1.msra.mxu0 0.0
    %561 = vmatprep.subr.mxu0 0.0
    %562 = vmatpush1.msra.mxu0 0.0
    %563 = vmatprep.subr.mxu0 0.0
    %564 = vmatpush1.msra.mxu0 0.0
    %565 = vmatprep.subr.mxu0 0.0
    %566 = vmatpush1.msra.mxu0 0.0
    %567 = vmatprep.subr.mxu0 0.0
    %568 = vmatpush1.msra.mxu0 0.0
    %569 = vmatprep.subr.mxu0 0.0
    %570 = vmatpush1.msra.mxu0 0.0
    %571 = vmatprep.subr.mxu0 0.0
    %572 = vmatpush1.msra.mxu0 0.0
    %573 = vmatprep.subr.mxu0 0.0
    %574 = vmatpush1.msra.mxu0 0.0
    %575 = vmatprep.subr.mxu0 0.0
    %576 = vmatpush1.msra.mxu0 0.0
    %577 = vmatprep.subr.mxu0 0.0
    %578 = vmatpush1.msra.mxu0 0.0
    %579 = vmatprep.subr.mxu0 0.0
    %580 = vmatpush1.msra.mxu0 0.0
    %581 = vmatprep.subr.mxu0 0.0
    %582 = vmatpush1.msra.mxu0 0.0
    %583 = vmatprep.subr.mxu0 0.0
    %584 = vmatpush1.msra.mxu0 0.0
    %585 = vmatprep.subr.mxu0 0.0
    %586 = vmatpush1.msra.mxu0 0.0
    %587 = vmatprep.subr.mxu0 0.0
    %588 = vmatpush1.msra.mxu0 0.0
    %589 = vmatprep.subr.mxu0 0.0
    %590 = vmatpush1.msra.mxu0 0.0
    %591 = vmatprep.subr.mxu0 0.0
    %592 = vmatpush1.msra.mxu0 0.0
    %593 = vmatprep.subr.mxu0 0.0
    %594 = vmatpush1.msra.mxu0 0.0
    %595 = vmatprep.subr.mxu0 0.0
    %596 = vmatpush1.msra.mxu0 0.0
    %597 = vmatprep.subr.mxu0 0.0
    %598 = vmatpush1.msra.mxu0 0.0
    %599 = vmatprep.subr.mxu0 0.0
    %600 = vmatpush1.msra.mxu0 0.0
    %601 = vmatprep.subr.mxu0 0.0
    %602 = vmatpush1.msra.mxu0 0.0
    %603 = vmatprep.subr.mxu0 0.0
    %604 = vmatpush1.msra.mxu0 0.0
    %605 = vmatprep.mubr.f32.mxu0 0.0
    %606 = vmatmul.mubr.f32.gmra.mrb[0].mxu0 %v539
    %v607 = vpop.f32.mrb[0].mxu0
    %v608 = vadd.f32 %v535, %v607
    %v609 = vpop.f32.mrb[0].mxu0
    %610 = vdwg.mxu0
    %v611 = vmul.f32 %v608, 0.5
    %v612 = vtanh.pop %v611
    %v613 = vadd.f32 %v612, 1.0
    %v614 = vmul.f32 %v613, 0.5
    %v615 = vmul.f32 %v608, %v614
    %vm616 = vcmask 261120
    %v618 = vsel %vm616, %v615, 0
    %620 = vmatprep.subr.mxu0 0.0
    %621 = vmatpush1.msra.mxu0 %v50
    %622 = vmatprep.subr.mxu0 0.0
    %623 = vmatpush1.msra.mxu0 %v51
    %624 = vmatprep.subr.mxu0 0.0
    %625 = vmatpush1.msra.mxu0 %v52
    %626 = vmatprep.subr.mxu0 0.0
    %627 = vmatpush1.msra.mxu0 %v53
    %628 = vmatprep.subr.mxu0 0.0
    %629 = vmatpush1.msra.mxu0 0.0
    %630 = vmatprep.subr.mxu0 0.0
    %631 = vmatpush1.msra.mxu0 0.0
    %632 = vmatprep.subr.mxu0 0.0
    %633 = vmatpush1.msra.mxu0 0.0
    %634 = vmatprep.subr.mxu0 0.0
    %635 = vmatpush1.msra.mxu0 0.0
    %636 = vmatprep.subr.mxu0 0.0
    %637 = vmatpush1.msra.mxu0 0.0
    %638 = vmatprep.subr.mxu0 0.0
    %639 = vmatpush1.msra.mxu0 0.0
    %640 = vmatprep.subr.mxu0 0.0
    %641 = vmatpush1.msra.mxu0 0.0
    %642 = vmatprep.subr.mxu0 0.0
    %643 = vmatpush1.msra.mxu0 0.0
    %644 = vmatprep.subr.mxu0 0.0
    %645 = vmatpush1.msra.mxu0 0.0
    %646 = vmatprep.subr.mxu0 0.0
    %647 = vmatpush1.msra.mxu0 0.0
    %648 = vmatprep.subr.mxu0 0.0
    %649 = vmatpush1.msra.mxu0 0.0
    %650 = vmatprep.subr.mxu0 0.0
    %651 = vmatpush1.msra.mxu0 0.0
    %652 = vmatprep.subr.mxu0 0.0
    %653 = vmatpush1.msra.mxu0 0.0
    %654 = vmatprep.subr.mxu0 0.0
    %655 = vmatpush1.msra.mxu0 0.0
    %656 = vmatprep.subr.mxu0 0.0
    %657 = vmatpush1.msra.mxu0 0.0
    %658 = vmatprep.subr.mxu0 0.0
    %659 = vmatpush1.msra.mxu0 0.0
    %660 = vmatprep.subr.mxu0 0.0
    %661 = vmatpush1.msra.mxu0 0.0
    %662 = vmatprep.subr.mxu0 0.0
    %663 = vmatpush1.msra.mxu0 0.0
    %664 = vmatprep.subr.mxu0 0.0
    %665 = vmatpush1.msra.mxu0 0.0
    %666 = vmatprep.subr.mxu0 0.0
    %667 = vmatpush1.msra.mxu0 0.0
    %668 = vmatprep.subr.mxu0 0.0
    %669 = vmatpush1.msra.mxu0 0.0
    %670 = vmatprep.subr.mxu0 0.0
    %671 = vmatpush1.msra.mxu0 0.0
    %672 = vmatprep.subr.mxu0 0.0
    %673 = vmatpush1.msra.mxu0 0.0
    %674 = vmatprep.subr.mxu0 0.0
    %675 = vmatpush1.msra.mxu0 0.0
    %676 = vmatprep.subr.mxu0 0.0
    %677 = vmatpush1.msra.mxu0 0.0
    %678 = vmatprep.subr.mxu0 0.0
    %679 = vmatpush1.msra.mxu0 0.0
    %680 = vmatprep.subr.mxu0 0.0
    %681 = vmatpush1.msra.mxu0 0.0
    %682 = vmatprep.subr.mxu0 0.0
    %683 = vmatpush1.msra.mxu0 0.0
    %684 = vmatprep.mubr.f32.mxu0 0.0
    %685 = vmatmul.mubr.f32.gmra.mrb[0].mxu0 %v618
    %v686 = vpop.f32.mrb[0].mxu0
    %v687 = vadd.f32 0.0, %v686
    %v688 = vpop.f32.mrb[0].mxu0
    %689 = vdwg.mxu0
    %691 = vset.pattern.permute.xlu0 0
    %692 = vperm.xlu0 %691, %v687
    %v693 = vpop.permute.xlu0 %692
    %v695 = vmul.f32 %v693, %v48
    %696 = vset.pattern.permute.xlu0 1
    %697 = vperm.xlu0 %696, %v687
    %v698 = vpop.permute.xlu0 %697
    %v701 = vrot.slane %v48, 1
    %v703 = vmul.f32 %v698, %v701
    %v704 = vadd.f32 %v695, %v703
    %705 = vset.pattern.permute.xlu0 2
    %706 = vperm.xlu0 %705, %v687
    %v707 = vpop.permute.xlu0 %706
    %v709 = vrot.slane %v48, 2
    %v711 = vmul.f32 %v707, %v709
    %v712 = vadd.f32 %v704, %v711
    %713 = vset.pattern.permute.xlu0 3
    %714 = vperm.xlu0 %713, %v687
    %v715 = vpop.permute.xlu0 %714
    %v717 = vrot.slane %v48, 3
    %v719 = vmul.f32 %v715, %v717
    %v720 = vadd.f32 %v712, %v719
    %v721 = vadd.f32 %v720, %v49
    %v722 = vmul.f32 %v721, 0.5
    %v723 = vtanh.pop %v722
    %v724 = vadd.f32 %v723, 1.0
    %v725 = vmul.f32 %v724, 0.5
    %v726 = vtanh.pop %v721
    %728 = vrot.lane.b32.xlu0 %v726, 120
    %v729 = vpop.permute.xlu0 %728
    %v731 = vmul.f32 %v725, %v729
    %v732 = vtanh.pop %v731
    %734 = vrot.lane.b32.xlu0 %v732, 12
    %v735 = vpop.permute.xlu0 %734
    %v737 = vmul.f32 %v725, %v735
    %v739 = vrot.slane %v737, 7
    %740 = vrot.lane.b32.xlu0 %v739, 126
    %v741 = vpop.permute.xlu0 %740
    %vm743 = vcmask 1040384
    %v744 = vsel %vm743, %v737, %v741
    %v745 = vld [vmem:[%s1 + $0xb0] sm:$0x1]
    %v746 = vld [vmem:[%s1 + $0xb8] sm:$0x1]
    %v747 = vld [vmem:[%s1 + $0xc0] sm:$0x3]
    %v748 = vld [vmem:[%s1 + $0xc8] sm:$0x3]
    %750 = vrot.lane.b32.xlu0 %v744, 116
    %v751 = vpop.permute.xlu0 %750
    %vm753 = vcmask 9216
    %v754 = vsel %vm753, %v751, 0.0
    %755 = vadd.xlane.f32.xlu0 %v754
    %v756 = vpop.xlane.xlu0 %755
    %v757 = vrcp.pop 2.0
    %v758 = vmul.f32 %v756, %v757
    %vm759 = vcmask 107616
    %v760 = vsel %vm759, %v744, -inf
    %761 = vmax.xlane.f32.xlu0 %v760
    %v762 = vpop.xlane.xlu0 %761
    %v763 = vsel %vm102, %v758, %v762
    %765 = vset.pattern.permute.xlu0 0
    %766 = vperm.xlu0 %765, %v745
    %v767 = vpop.permute.xlu0 %766
    %v769 = vmul.f32 %v767, %v763
    %770 = vset.pattern.permute.xlu0 1
    %771 = vperm.xlu0 %770, %v745
    %v772 = vpop.permute.xlu0 %771
    %v775 = vrot.slane %v763, 1
    %v777 = vmul.f32 %v772, %v775
    %v778 = vadd.f32 %v769, %v777
    %780 = vset.pattern.permute.xlu0 0
    %781 = vperm.xlu0 %780, %v746
    %v782 = vpop.permute.xlu0 %781
    %v784 = vadd.f32 %v778, %v782
    %v785 = vmax.f32 %v784, 0.0
    %787 = vset.pattern.permute.xlu0 0
    %788 = vperm.xlu0 %787, %v747
    %v789 = vpop.permute.xlu0 %788
    %v791 = vlaneseq
    %v792 = vshrl.u32 %v791, 7
    %v793 = vsub.s32 0, %v792
    %v794 = vrot.slane %v785, %v793
    %v795 = vmul.f32 %v789, %v794
    %797 = vset.pattern.permute.xlu0 0
    %798 = vperm.xlu0 %797, %v748
    %v799 = vpop.permute.xlu0 %798
    %v801 = vadd.f32 %v795, %v799
    %803 = vrot.lane.b32.xlu0 %v801, 127
    %v804 = vpop.permute.xlu0 %803
    %v806 = vadd.f32 %v801, %v804
    %v807 = vmul.f32 %v806, 0.5
    %v808 = vtanh.pop %v807
    %v809 = vadd.f32 %v808, 1.0
    %v810 = vmul.f32 %v809, 0.5
    %812 = vset.pattern.permute.xlu0 0
    %813 = vperm.xlu0 %812, %v810
    %v814 = vpop.permute.xlu0 %813
    %v816 = vmul.f32 %v744, %v814
    %818 = vrot.lane.b32.xlu0 %v816, 116
    %v819 = vpop.permute.xlu0 %818
    %v820 = vsel %vm272, %v819, 0
    %v822 = vsel %vm272, %v751, 0
    %824 = vmatprep.subr.mxu0 0.0
    %825 = vmatpush1.xpose.msra.mxu0 %v822
    %826 = vmatprep.subr.mxu0 0.0
    %827 = vmatpush1.xpose.msra.mxu0 0.0
    %828 = vmatprep.subr.mxu0 0.0
    %829 = vmatpush1.xpose.msra.mxu0 0.0
    %830 = vmatprep.subr.mxu0 0.0
    %831 = vmatpush1.xpose.msra.mxu0 0.0
    %832 = vmatprep.subr.mxu0 0.0
    %833 = vmatpush1.xpose.msra.mxu0 0.0
    %834 = vmatprep.subr.mxu0 0.0
    %835 = vmatpush1.xpose.msra.mxu0 0.0
    %836 = vmatprep.subr.mxu0 0.0
    %837 = vmatpush1.xpose.msra.mxu0 0.0
    %838 = vmatprep.subr.mxu0 0.0
    %839 = vmatpush1.xpose.msra.mxu0 0.0
    %840 = vmatprep.subr.mxu0 0.0
    %841 = vmatpush1.xpose.msra.mxu0 0.0
    %842 = vmatprep.subr.mxu0 0.0
    %843 = vmatpush1.xpose.msra.mxu0 0.0
    %844 = vmatprep.subr.mxu0 0.0
    %845 = vmatpush1.xpose.msra.mxu0 0.0
    %846 = vmatprep.subr.mxu0 0.0
    %847 = vmatpush1.xpose.msra.mxu0 0.0
    %848 = vmatprep.subr.mxu0 0.0
    %849 = vmatpush1.xpose.msra.mxu0 0.0
    %850 = vmatprep.subr.mxu0 0.0
    %851 = vmatpush1.xpose.msra.mxu0 0.0
    %852 = vmatprep.subr.mxu0 0.0
    %853 = vmatpush1.xpose.msra.mxu0 0.0
    %854 = vmatprep.subr.mxu0 0.0
    %855 = vmatpush1.xpose.msra.mxu0 0.0
    %856 = vmatprep.subr.mxu0 0.0
    %857 = vmatpush1.xpose.msra.mxu0 0.0
    %858 = vmatprep.subr.mxu0 0.0
    %859 = vmatpush1.xpose.msra.mxu0 0.0
    %860 = vmatprep.subr.mxu0 0.0
    %861 = vmatpush1.xpose.msra.mxu0 0.0
    %862 = vmatprep.subr.mxu0 0.0
    %863 = vmatpush1.xpose.msra.mxu0 0.0
    %864 = vmatprep.subr.mxu0 0.0
    %865 = vmatpush1.xpose.msra.mxu0 0.0
    %866 = vmatprep.subr.mxu0 0.0
    %867 = vmatpush1.xpose.msra.mxu0 0.0
    %868 = vmatprep.subr.mxu0 0.0
    %869 = vmatpush1.xpose.msra.mxu0 0.0
    %870 = vmatprep.subr.mxu0 0.0
    %871 = vmatpush1.xpose.msra.mxu0 0.0
    %872 = vmatprep.subr.mxu0 0.0
    %873 = vmatpush1.xpose.msra.mxu0 0.0
    %874 = vmatprep.subr.mxu0 0.0
    %875 = vmatpush1.xpose.msra.mxu0 0.0
    %876 = vmatprep.subr.mxu0 0.0
    %877 = vmatpush1.xpose.msra.mxu0 0.0
    %878 = vmatprep.subr.mxu0 0.0
    %879 = vmatpush1.xpose.msra.mxu0 0.0
    %880 = vmatprep.subr.mxu0 0.0
    %881 = vmatpush1.xpose.msra.mxu0 0.0
    %882 = vmatprep.subr.mxu0 0.0
    %883 = vmatpush1.xpose.msra.mxu0 0.0
    %884 = vmatprep.subr.mxu0 0.0
    %885 = vmatpush1.xpose.msra.mxu0 0.0
    %886 = vmatprep.subr.mxu0 0.0
    %887 = vmatpush1.xpose.msra.mxu0 0.0
    %888 = vmatprep.mubr.f32.mxu0 0.0
    %889 = vmatmul.mubr.f32.gmra.mrb[0].mxu0 %v820
    %v890 = vpop.f32.mrb[0].mxu0
    %v891 = vadd.f32 0.0, %v890
    %v892 = vpop.f32.mrb[0].mxu0
    %893 = vdwg.mxu0
    %v895 = vrot.slane %v891, 1
    %896 = vrot.lane.b32.xlu0 %v895, 2
    %v897 = vpop.permute.xlu0 %896
    %v899 = vsel %vm272, %v891, %v897
    %v900 = vrot.slane %v687, 7
    %901 = vrot.lane.b32.xlu0 %v900, 126
    %v902 = vpop.permute.xlu0 %901
    %v904 = vrot.slane %v891, 6
    %v906 = vsel %vm743, %v687, %v902
    %vm907 = vcmask 1041408
    %v908 = vsel %vm907, %v906, %v904
    %v909 = vld [vmem:[%s1 + $0xd0] sm:$0x3]
    %v910 = vld [vmem:[%s1 + $0xd8] sm:$0x3]
    %v911 = vld [vmem:[%s1 + $0xe0] sm:$0xf]
    %v912 = vld [vmem:[%s1 + $0xe8] sm:$0xf]
    %vm913 = vcmask 11264
    %v914 = vsel %vm913, %v908, 0.0
    %915 = vadd.xlane.f32.xlu0 %v914
    %v916 = vpop.xlane.xlu0 %915
    %v917 = vmul.f32 %v916, %v757
    %v918 = vsel %vm913, %v908, -inf
    %919 = vmax.xlane.f32.xlu0 %v918
    %v920 = vpop.xlane.xlu0 %919
    %v921 = vsel %vm102, %v917, %v920
    %923 = vset.pattern.permute.xlu0 0
    %924 = vperm.xlu0 %923, %v909
    %v925 = vpop.permute.xlu0 %924
    %v927 = vlaneseq
    %v928 = vshrl.u32 %v927, 7
    %v929 = vsub.s32 0, %v928
    %v930 = vrot.slane %v921, %v929
    %v931 = vmul.f32 %v925, %v930
    %932 = vset.pattern.permute.xlu0 1
    %933 = vperm.xlu0 %932, %v909
    %v934 = vpop.permute.xlu0 %933
    %v936 = vlaneseq
    %v937 = vshrl.u32 %v936, 7
    %v938 = vsub.s32 1, %v937
    %v939 = vrot.slane %v921, %v938
    %v940 = vmul.f32 %v934, %v939
    %v941 = vadd.f32 %v931, %v940
    %942 = vset.pattern.permute.xlu0 2
    %943 = vperm.xlu0 %942, %v909
    %v944 = vpop.permute.xlu0 %943
    %v946 = vlaneseq
    %v947 = vshrl.u32 %v946, 7
    %v948 = vsub.s32 2, %v947
    %v949 = vrot.slane %v921, %v948
    %v950 = vmul.f32 %v944, %v949
    %v951 = vadd.f32 %v941, %v950
    %952 = vset.pattern.permute.xlu0 3
    %953 = vperm.xlu0 %952, %v909
    %v954 = vpop.permute.xlu0 %953
    %v956 = vlaneseq
    %v957 = vshrl.u32 %v956, 7
    %v958 = vsub.s32 3, %v957
    %v959 = vrot.slane %v921, %v958
    %v960 = vmul.f32 %v954, %v959
    %v961 = vadd.f32 %v951, %v960
    %963 = vset.pattern.permute.xlu0 0
    %964 = vperm.xlu0 %963, %v910
    %v965 = vpop.permute.xlu0 %964
    %v967 = vadd.f32 %v961, %v965
    %v968 = vmax.f32 %v967, 0.0
    %970 = vset.pattern.permute.xlu0 0
    %971 = vperm.xlu0 %970, %v911
    %v972 = vpop.permute.xlu0 %971
    %v974 = vlaneseq
    %v975 = vshrl.u32 %v974, 7
    %v976 = vsub.s32 0, %v975
    %v977 = vrot.slane %v968, %v976
    %v978 = vmul.f32 %v972, %v977
    %979 = vset.pattern.permute.xlu0 1
    %980 = vperm.xlu0 %979, %v911
    %v981 = vpop.permute.xlu0 %980
    %v983 = vlaneseq
    %v984 = vshrl.u32 %v983, 7
    %v985 = vsub.s32 1, %v984
    %v986 = vrot.slane %v968, %v985
    %v987 = vmul.f32 %v981, %v986
    %v988 = vadd.f32 %v978, %v987
    %990 = vset.pattern.permute.xlu0 0
    %991 = vperm.xlu0 %990, %v912
    %v992 = vpop.permute.xlu0 %991
    %v994 = vadd.f32 %v988, %v992
    %996 = vrot.lane.b32.xlu0 %v994, 127
    %v997 = vpop.permute.xlu0 %996
    %v999 = vadd.f32 %v994, %v997
    %v1000 = vmul.f32 %v999, 0.5
    %v1001 = vtanh.pop %v1000
    %v1002 = vadd.f32 %v1001, 1.0
    %v1003 = vmul.f32 %v1002, 0.5
    %1005 = vset.pattern.permute.xlu0 0
    %1006 = vperm.xlu0 %1005, %v1003
    %v1007 = vpop.permute.xlu0 %1006
    %v1009 = vmul.f32 %v908, %v1007
    %v1011 = vsel %vm272, %v1009, 0
    %v1014 = vsel %vm272, %v908, 0
    %1016 = vmatprep.subr.mxu0 0.0
    %1017 = vmatpush1.xpose.msra.mxu0 %v1014
    %1018 = vmatprep.subr.mxu0 0.0
    %1019 = vmatpush1.xpose.msra.mxu0 0.0
    %1020 = vmatprep.subr.mxu0 0.0
    %1021 = vmatpush1.xpose.msra.mxu0 0.0
    %1022 = vmatprep.subr.mxu0 0.0
    %1023 = vmatpush1.xpose.msra.mxu0 0.0
    %1024 = vmatprep.subr.mxu0 0.0
    %1025 = vmatpush1.xpose.msra.mxu0 0.0
    %1026 = vmatprep.subr.mxu0 0.0
    %1027 = vmatpush1.xpose.msra.mxu0 0.0
    %1028 = vmatprep.subr.mxu0 0.0
    %1029 = vmatpush1.xpose.msra.mxu0 0.0
    %1030 = vmatprep.subr.mxu0 0.0
    %1031 = vmatpush1.xpose.msra.mxu0 0.0
    %1032 = vmatprep.subr.mxu0 0.0
    %1033 = vmatpush1.xpose.msra.mxu0 0.0
    %1034 = vmatprep.subr.mxu0 0.0
    %1035 = vmatpush1.xpose.msra.mxu0 0.0
    %1036 = vmatprep.subr.mxu0 0.0
    %1037 = vmatpush1.xpose.msra.mxu0 0.0
    %1038 = vmatprep.subr.mxu0 0.0
    %1039 = vmatpush1.xpose.msra.mxu0 0.0
    %1040 = vmatprep.subr.mxu0 0.0
    %1041 = vmatpush1.xpose.msra.mxu0 0.0
    %1042 = vmatprep.subr.mxu0 0.0
    %1043 = vmatpush1.xpose.msra.mxu0 0.0
    %1044 = vmatprep.subr.mxu0 0.0
    %1045 = vmatpush1.xpose.msra.mxu0 0.0
    %1046 = vmatprep.subr.mxu0 0.0
    %1047 = vmatpush1.xpose.msra.mxu0 0.0
    %1048 = vmatprep.subr.mxu0 0.0
    %1049 = vmatpush1.xpose.msra.mxu0 0.0
    %1050 = vmatprep.subr.mxu0 0.0
    %1051 = vmatpush1.xpose.msra.mxu0 0.0
    %1052 = vmatprep.subr.mxu0 0.0
    %1053 = vmatpush1.xpose.msra.mxu0 0.0
    %1054 = vmatprep.subr.mxu0 0.0
    %1055 = vmatpush1.xpose.msra.mxu0 0.0
    %1056 = vmatprep.subr.mxu0 0.0
    %1057 = vmatpush1.xpose.msra.mxu0 0.0
    %1058 = vmatprep.subr.mxu0 0.0
    %1059 = vmatpush1.xpose.msra.mxu0 0.0
    %1060 = vmatprep.subr.mxu0 0.0
    %1061 = vmatpush1.xpose.msra.mxu0 0.0
    %1062 = vmatprep.subr.mxu0 0.0
    %1063 = vmatpush1.xpose.msra.mxu0 0.0
    %1064 = vmatprep.subr.mxu0 0.0
    %1065 = vmatpush1.xpose.msra.mxu0 0.0
    %1066 = vmatprep.subr.mxu0 0.0
    %1067 = vmatpush1.xpose.msra.mxu0 0.0
    %1068 = vmatprep.subr.mxu0 0.0
    %1069 = vmatpush1.xpose.msra.mxu0 0.0
    %1070 = vmatprep.subr.mxu0 0.0
    %1071 = vmatpush1.xpose.msra.mxu0 0.0
    %1072 = vmatprep.subr.mxu0 0.0
    %1073 = vmatpush1.xpose.msra.mxu0 0.0
    %1074 = vmatprep.subr.mxu0 0.0
    %1075 = vmatpush1.xpose.msra.mxu0 0.0
    %1076 = vmatprep.subr.mxu0 0.0
    %1077 = vmatpush1.xpose.msra.mxu0 0.0
    %1078 = vmatprep.subr.mxu0 0.0
    %1079 = vmatpush1.xpose.msra.mxu0 0.0
    %1080 = vmatprep.mubr.f32.mxu0 0.0
    %1081 = vmatmul.mubr.f32.gmra.mrb[0].mxu0 %v1011
    %v1082 = vpop.f32.mrb[0].mxu0
    %v1083 = vadd.f32 0.0, %v1082
    %v1084 = vpop.f32.mrb[0].mxu0
    %1085 = vdwg.mxu0
    %v1087 = vrot.slane %v1083, 1
    %1088 = vrot.lane.b32.xlu0 %v1087, 4
    %v1089 = vpop.permute.xlu0 %1088
    %v1091 = vrot.slane %v1083, 2
    %1092 = vrot.lane.b32.xlu0 %v1091, 8
    %v1093 = vpop.permute.xlu0 %1092
    %v1095 = vrot.slane %v1083, 3
    %1096 = vrot.lane.b32.xlu0 %v1095, 12
    %v1097 = vpop.permute.xlu0 %1096
    %v1099 = vsel %vm71, %v1083, %v1089
    %v1100 = vsel %vm537, %v1099, %v1093
    %v1101 = vsel %vm118, %v1100, %v1097
    %v1102 = vld [vmem:[%s1 + $0xf0] sm:$0xff]
    %v1103 = vld [vmem:[%s1 + $0xf8] sm:$0xff]
    %v1104 = vld [vmem:[%s1 + $0x100] sm:$0x1]
    %v1106 = vsel %vm330, %v1101, 0
    %1108 = vmatprep.subr.mxu0 0.0
    %1109 = vmatpush1.msra.mxu0 %v1102
    %1110 = vmatprep.subr.mxu0 0.0
    %1111 = vmatpush1.msra.mxu0 %v1103
    %1112 = vmatprep.subr.mxu0 0.0
    %1113 = vmatpush1.msra.mxu0 0.0
    %1114 = vmatprep.subr.mxu0 0.0
    %1115 = vmatpush1.msra.mxu0 0.0
    %1116 = vmatprep.subr.mxu0 0.0
    %1117 = vmatpush1.msra.mxu0 0.0
    %1118 = vmatprep.subr.mxu0 0.0
    %1119 = vmatpush1.msra.mxu0 0.0
    %1120 = vmatprep.subr.mxu0 0.0
    %1121 = vmatpush1.msra.mxu0 0.0
    %1122 = vmatprep.subr.mxu0 0.0
    %1123 = vmatpush1.msra.mxu0 0.0
    %1124 = vmatprep.subr.mxu0 0.0
    %1125 = vmatpush1.msra.mxu0 0.0
    %1126 = vmatprep.subr.mxu0 0.0
    %1127 = vmatpush1.msra.mxu0 0.0
    %1128 = vmatprep.subr.mxu0 0.0
    %1129 = vmatpush1.msra.mxu0 0.0
    %1130 = vmatprep.subr.mxu0 0.0
    %1131 = vmatpush1.msra.mxu0 0.0
    %1132 = vmatprep.subr.mxu0 0.0
    %1133 = vmatpush1.msra.mxu0 0.0
    %1134 = vmatprep.subr.mxu0 0.0
    %1135 = vmatpush1.msra.mxu0 0.0
    %1136 = vmatprep.subr.mxu0 0.0
    %1137 = vmatpush1.msra.mxu0 0.0
    %1138 = vmatprep.subr.mxu0 0.0
    %1139 = vmatpush1.msra.mxu0 0.0
    %1140 = vmatprep.subr.mxu0 0.0
    %1141 = vmatpush1.msra.mxu0 0.0
    %1142 = vmatprep.subr.mxu0 0.0
    %1143 = vmatpush1.msra.mxu0 0.0
    %1144 = vmatprep.subr.mxu0 0.0
    %1145 = vmatpush1.msra.mxu0 0.0
    %1146 = vmatprep.subr.mxu0 0.0
    %1147 = vmatpush1.msra.mxu0 0.0
    %1148 = vmatprep.subr.mxu0 0.0
    %1149 = vmatpush1.msra.mxu0 0.0
    %1150 = vmatprep.subr.mxu0 0.0
    %1151 = vmatpush1.msra.mxu0 0.0
    %1152 = vmatprep.subr.mxu0 0.0
    %1153 = vmatpush1.msra.mxu0 0.0
    %1154 = vmatprep.subr.mxu0 0.0
    %1155 = vmatpush1.msra.mxu0 0.0
    %1156 = vmatprep.subr.mxu0 0.0
    %1157 = vmatpush1.msra.mxu0 0.0
    %1158 = vmatprep.subr.mxu0 0.0
    %1159 = vmatpush1.msra.mxu0 0.0
    %1160 = vmatprep.subr.mxu0 0.0
    %1161 = vmatpush1.msra.mxu0 0.0
    %1162 = vmatprep.subr.mxu0 0.0
    %1163 = vmatpush1.msra.mxu0 0.0
    %1164 = vmatprep.subr.mxu0 0.0
    %1165 = vmatpush1.msra.mxu0 0.0
    %1166 = vmatprep.subr.mxu0 0.0
    %1167 = vmatpush1.msra.mxu0 0.0
    %1168 = vmatprep.subr.mxu0 0.0
    %1169 = vmatpush1.msra.mxu0 0.0
    %1170 = vmatprep.subr.mxu0 0.0
    %1171 = vmatpush1.msra.mxu0 0.0
    %1172 = vmatprep.mubr.f32.mxu0 0.0
    %1173 = vmatmul.mubr.f32.gmra.mrb[0].mxu0 %v1106
    %v1174 = vpop.f32.mrb[0].mxu0
    %v1175 = vadd.f32 %v1104, %v1174
    %v1176 = vpop.f32.mrb[0].mxu0
    %1177 = vdwg.mxu0
    %v1178 = vmax.f32 %v1175, 0.0
    %1180 = vrot.lane.b32.xlu0 %v1178, 4
    %v1181 = vpop.permute.xlu0 %1180
    %v1183 = vsel %vm71, %v899, %v1181
    %v1184 = vld [vmem:[%s1 + $0x108] sm:$0xff]
    %v1185 = vld [vmem:[%s1 + $0x110] sm:$0x1]
    %v1187 = vsel %vm537, %v1183, 0
    %1189 = vmatprep.subr.mxu0 0.0
    %1190 = vmatpush1.msra.mxu0 %v1184
    %1191 = vmatprep.subr.mxu0 0.0
    %1192 = vmatpush1.msra.mxu0 0.0
    %1193 = vmatprep.subr.mxu0 0.0
    %1194 = vmatpush1.msra.mxu0 0.0
    %1195 = vmatprep.subr.mxu0 0.0
    %1196 = vmatpush1.msra.mxu0 0.0
    %1197 = vmatprep.subr.mxu0 0.0
    %1198 = vmatpush1.msra.mxu0 0.0
    %1199 = vmatprep.subr.mxu0 0.0
    %1200 = vmatpush1.msra.mxu0 0.0
    %1201 = vmatprep.subr.mxu0 0.0
    %1202 = vmatpush1.msra.mxu0 0.0
    %1203 = vmatprep.subr.mxu0 0.0
    %1204 = vmatpush1.msra.mxu0 0.0
    %1205 = vmatprep.subr.mxu0 0.0
    %1206 = vmatpush1.msra.mxu0 0.0
    %1207 = vmatprep.subr.mxu0 0.0
    %1208 = vmatpush1.msra.mxu0 0.0
    %1209 = vmatprep.subr.mxu0 0.0
    %1210 = vmatpush1.msra.mxu0 0.0
    %1211 = vmatprep.subr.mxu0 0.0
    %1212 = vmatpush1.msra.mxu0 0.0
    %1213 = vmatprep.subr.mxu0 0.0
    %1214 = vmatpush1.msra.mxu0 0.0
    %1215 = vmatprep.subr.mxu0 0.0
    %1216 = vmatpush1.msra.mxu0 0.0
    %1217 = vmatprep.subr.mxu0 0.0
    %1218 = vmatpush1.msra.mxu0 0.0
    %1219 = vmatprep.subr.mxu0 0.0
    %1220 = vmatpush1.msra.mxu0 0.0
    %1221 = vmatprep.subr.mxu0 0.0
    %1222 = vmatpush1.msra.mxu0 0.0
    %1223 = vmatprep.subr.mxu0 0.0
    %1224 = vmatpush1.msra.mxu0 0.0
    %1225 = vmatprep.subr.mxu0 0.0
    %1226 = vmatpush1.msra.mxu0 0.0
    %1227 = vmatprep.subr.mxu0 0.0
    %1228 = vmatpush1.msra.mxu0 0.0
    %1229 = vmatprep.subr.mxu0 0.0
    %1230 = vmatpush1.msra.mxu0 0.0
    %1231 = vmatprep.subr.mxu0 0.0
    %1232 = vmatpush1.msra.mxu0 0.0
    %1233 = vmatprep.subr.mxu0 0.0
    %1234 = vmatpush1.msra.mxu0 0.0
    %1235 = vmatprep.subr.mxu0 0.0
    %1236 = vmatpush1.msra.mxu0 0.0
    %1237 = vmatprep.subr.mxu0 0.0
    %1238 = vmatpush1.msra.mxu0 0.0
    %1239 = vmatprep.subr.mxu0 0.0
    %1240 = vmatpush1.msra.mxu0 0.0
    %1241 = vmatprep.subr.mxu0 0.0
    %1242 = vmatpush1.msra.mxu0 0.0
    %1243 = vmatprep.subr.mxu0 0.0
    %1244 = vmatpush1.msra.mxu0 0.0
    %1245 = vmatprep.subr.mxu0 0.0
    %1246 = vmatpush1.msra.mxu0 0.0
    %1247 = vmatprep.subr.mxu0 0.0
    %1248 = vmatpush1.msra.mxu0 0.0
    %1249 = vmatprep.subr.mxu0 0.0
    %1250 = vmatpush1.msra.mxu0 0.0
    %1251 = vmatprep.subr.mxu0 0.0
    %1252 = vmatpush1.msra.mxu0 0.0
    %1253 = vmatprep.mubr.f32.mxu0 0.0
    %1254 = vmatmul.mubr.f32.gmra.mrb[0].mxu0 %v1187
    %v1255 = vpop.f32.mrb[0].mxu0
    %v1256 = vadd.f32 %v1185, %v1255
    %v1257 = vpop.f32.mrb[0].mxu0
    %1258 = vdwg.mxu0
    %v1259 = vmax.f32 %v1256, 0.0
    %1261 = vrot.lane.b32.xlu0 %v1259, 4
    %v1262 = vpop.permute.xlu0 %1261
    %v1264 = vsel %vm71, %v687, %v1262
    %v1265 = vld [vmem:[%s1 + $0x118] sm:$0xff]
    %v1266 = vld [vmem:[%s1 + $0x120] sm:$0x1]
    %v1268 = vsel %vm537, %v1264, 0
    %1270 = vmatprep.subr.mxu0 0.0
    %1271 = vmatpush1.msra.mxu0 %v1265
    %1272 = vmatprep.subr.mxu0 0.0
    %1273 = vmatpush1.msra.mxu0 0.0
    %1274 = vmatprep.subr.mxu0 0.0
    %1275 = vmatpush1.msra.mxu0 0.0
    %1276 = vmatprep.subr.mxu0 0.0
    %1277 = vmatpush1.msra.mxu0 0.0
    %1278 = vmatprep.subr.mxu0 0.0
    %1279 = vmatpush1.msra.mxu0 0.0
    %1280 = vmatprep.subr.mxu0 0.0
    %1281 = vmatpush1.msra.mxu0 0.0
    %1282 = vmatprep.subr.mxu0 0.0
    %1283 = vmatpush1.msra.mxu0 0.0
    %1284 = vmatprep.subr.mxu0 0.0
    %1285 = vmatpush1.msra.mxu0 0.0
    %1286 = vmatprep.subr.mxu0 0.0
    %1287 = vmatpush1.msra.mxu0 0.0
    %1288 = vmatprep.subr.mxu0 0.0
    %1289 = vmatpush1.msra.mxu0 0.0
    %1290 = vmatprep.subr.mxu0 0.0
    %1291 = vmatpush1.msra.mxu0 0.0
    %1292 = vmatprep.subr.mxu0 0.0
    %1293 = vmatpush1.msra.mxu0 0.0
    %1294 = vmatprep.subr.mxu0 0.0
    %1295 = vmatpush1.msra.mxu0 0.0
    %1296 = vmatprep.subr.mxu0 0.0
    %1297 = vmatpush1.msra.mxu0 0.0
    %1298 = vmatprep.subr.mxu0 0.0
    %1299 = vmatpush1.msra.mxu0 0.0
    %1300 = vmatprep.subr.mxu0 0.0
    %1301 = vmatpush1.msra.mxu0 0.0
    %1302 = vmatprep.subr.mxu0 0.0
    %1303 = vmatpush1.msra.mxu0 0.0
    %1304 = vmatprep.subr.mxu0 0.0
    %1305 = vmatpush1.msra.mxu0 0.0
    %1306 = vmatprep.subr.mxu0 0.0
    %1307 = vmatpush1.msra.mxu0 0.0
    %1308 = vmatprep.subr.mxu0 0.0
    %1309 = vmatpush1.msra.mxu0 0.0
    %1310 = vmatprep.subr.mxu0 0.0
    %1311 = vmatpush1.msra.mxu0 0.0
    %1312 = vmatprep.subr.mxu0 0.0
    %1313 = vmatpush1.msra.mxu0 0.0
    %1314 = vmatprep.subr.mxu0 0.0
    %1315 = vmatpush1.msra.mxu0 0.0
    %1316 = vmatprep.subr.mxu0 0.0
    %1317 = vmatpush1.msra.mxu0 0.0
    %1318 = vmatprep.subr.mxu0 0.0
    %1319 = vmatpush1.msra.mxu0 0.0
    %1320 = vmatprep.subr.mxu0 0.0
    %1321 = vmatpush1.msra.mxu0 0.0
    %1322 = vmatprep.subr.mxu0 0.0
    %1323 = vmatpush1.msra.mxu0 0.0
    %1324 = vmatprep.subr.mxu0 0.0
    %1325 = vmatpush1.msra.mxu0 0.0
    %1326 = vmatprep.subr.mxu0 0.0
    %1327 = vmatpush1.msra.mxu0 0.0
    %1328 = vmatprep.subr.mxu0 0.0
    %1329 = vmatpush1.msra.mxu0 0.0
    %1330 = vmatprep.subr.mxu0 0.0
    %1331 = vmatpush1.msra.mxu0 0.0
    %1332 = vmatprep.subr.mxu0 0.0
    %1333 = vmatpush1.msra.mxu0 0.0
    %1334 = vmatprep.mubr.f32.mxu0 0.0
    %1335 = vmatmul.mubr.f32.gmra.mrb[0].mxu0 %v1268
    %v1336 = vpop.f32.mrb[0].mxu0
    %v1337 = vadd.f32 %v1266, %v1336
    %v1338 = vpop.f32.mrb[0].mxu0
    %1339 = vdwg.mxu0
    %v1340 = vmax.f32 %v1337, 0.0
    %s1341 = scalar_lea.vmem %s2, %s55
    %vm1342 = vcmask 24576
    %1343 = vst.msk [vmem:[%s1341] sm:$0x1] %vm1342, %v1178
    %1345 = vrot.lane.b32.xlu0 %v1340, 4
    %v1346 = vpop.permute.xlu0 %1345
    %vm1348 = vcmask 57376
    %1349 = vst.msk [vmem:[%s1341] sm:$0x1] %vm1348, %v1346
  $region14: #{kt_rollout.1} parent=0 // loop_footer
    %s59 = sadd.s32 1, %s55
  $region15: #{kt_rollout.1} parent=0 // loop_footer_branch
    %54 = sbr.rel target = $region11
  $region16: #{kt_rollout.1} parent=0 // loop_exit
    _
  // Predicated region
  $region17: #{kt_rollout.1} parent=0 // pred_check
    _
  $region18: #{kt_rollout.1} parent=0 // pred_check_branch
    %1351 = sbr.rel (0) target = $region20
  $region19: #{kt_rollout.1} parent=0 // pred_region
    _
  $region20: #{kt_rollout.1} parent=0 // pred_fallthru
    _
  // Predicated region
  $region21: #{kt_rollout.1} parent=0 // pred_check
    _
  $region22: #{kt_rollout.1} parent=0 // pred_check_branch
    %1353 = sbr.rel (0) target = $region24
  $region23: #{kt_rollout.1} parent=0 // pred_region
    _
  $region24: #{kt_rollout.1} parent=0 // pred_fallthru
    _

</llo_original>
